<compile_context>
chip_gen: v7x
topology: tpu7x:2x2x1
jax: 0.10.0
libtpu: 0.0.40
codegen_flags: <defaults>
</compile_context>

<pallas_src>
import jax
import jax.numpy as jnp
from jax import lax
from jax.experimental import pallas as pl
from jax.experimental.pallas import tpu as pltpu

BLOCK_SIZE = 32                      # max sequence length of the torch module
EMBED_DIM = 100                      # embedding_dimension
NUM_HEAD = 4
HEAD_SIZE = EMBED_DIM // NUM_HEAD    # 25

C_PAD = 128                          # embedding dim padded to the 128-lane width
HS_PAD = 32                          # per-head slot width (head size 25 padded to 32 lanes)


def multihead_kernel(x_ref, wqkv_ref, wo_ref, bo_ref, o_ref):
    # x_ref:    (B, T, C_PAD)          lane-padded input (pad lanes are zero)
    # wqkv_ref: (C_PAD, 3*H*HS_PAD)    fused Q|K|V projection, zero-padded
    # wo_ref:   (C_PAD, EMBED_DIM)     output projection, rows follow padded head layout
    # bo_ref:   (1, EMBED_DIM)
    # o_ref:    (B, T, EMBED_DIM)
    B, T, _ = x_ref.shape
    scale = EMBED_DIM ** (-0.5)       # torch scales by C (embedding dim), not head_size

    # Fold batch into the matmul M dim: ONE fat MXU matmul for all heads' Q, K and V.
    x2d = x_ref[...].reshape(B * T, C_PAD)                       # leading-dim merge: free
    qkv = jnp.dot(x2d, wqkv_ref[...],
                  preferred_element_type=jnp.float32)            # (B*T, 3*H*HS_PAD)
    qkv = qkv.reshape(B, T, 3 * NUM_HEAD * HS_PAD)

    # Causal mask shared by every batch element / head.
    row = lax.broadcasted_iota(jnp.int32, (T, T), 0)
    col = lax.broadcasted_iota(jnp.int32, (T, T), 1)
    causal = (col <= row)[None]                                  # (1, T, T)

    q_off = 0
    k_off = NUM_HEAD * HS_PAD
    v_off = 2 * NUM_HEAD * HS_PAD

    # Per-head accumulation straight into the output projection (no concat scratch,
    # no sub-128-lane masked stores).
    acc = jnp.zeros((B * T, EMBED_DIM), jnp.float32)
    for h in range(NUM_HEAD):                                    # unrolled, H = 4
        s = h * HS_PAD
        q = qkv[:, :, q_off + s: q_off + s + HS_PAD]             # (B, T, HS_PAD)
        k = qkv[:, :, k_off + s: k_off + s + HS_PAD]
        v = qkv[:, :, v_off + s: v_off + s + HS_PAD]

        # Batched over B, contracting the shared head dim (pad lanes are exactly zero).
        wei = lax.dot_general(q, k, (((2,), (2,)), ((0,), (0,))),
                              preferred_element_type=jnp.float32) * scale   # (B, T, T)
        wei = jnp.where(causal, wei, -jnp.inf)

        # Numerically-stable softmax with EXACT normalization (approx=False).
        wei = wei - jnp.max(wei, axis=-1, keepdims=True)
        p = jnp.exp(wei)
        p = p * pl.reciprocal(jnp.sum(p, axis=-1, keepdims=True), approx=False)

        head = lax.dot_general(p, v, (((2,), (1,)), ((0,), (0,))),
                               preferred_element_type=jnp.float32)          # (B, T, HS_PAD)
        acc = acc + jnp.dot(head.reshape(B * T, HS_PAD),
                            wo_ref[s:s + HS_PAD, :],
                            preferred_element_type=jnp.float32)             # (B*T, C)

    out = acc + bo_ref[...]                                      # (B*T, C) + (1, C)
    o_ref[...] = out.reshape(B, T, EMBED_DIM).astype(o_ref.dtype)


def pack_params(wq, wk, wv, wo, bo):
    """One-time host-side packing into the fused / lane-padded layout.

    wq/wk/wv: (H, C, hs) per-head projections (applied as x @ W).
    wo: (C, C) output projection (applied as cat @ wo).  bo: (1, C).
    """
    H, C, hs = wq.shape
    wqkv = jnp.zeros((C_PAD, 3 * H * HS_PAD), jnp.float32)
    for kind, w in enumerate((wq, wk, wv)):
        for h in range(H):
            col0 = kind * H * HS_PAD + h * HS_PAD
            wqkv = wqkv.at[:C, col0:col0 + hs].set(w[h])

    # Output-projection rows re-indexed to the padded 32-lane-per-head layout.
    wo_packed = jnp.zeros((C_PAD, C), jnp.float32)
    for h in range(H):
        wo_packed = wo_packed.at[h * HS_PAD:h * HS_PAD + hs, :].set(
            wo[h * hs:(h + 1) * hs, :])

    return wqkv, wo_packed, bo.astype(jnp.float32)


def multihead_forward(x, wqkv, wo_packed, bo):
    """x: (B, T, C) with C == EMBED_DIM and T <= BLOCK_SIZE."""
    B, T, C = x.shape
    # Zero-pad embedding lanes once on the host (guarantees zero pad lanes in the
    # fused QKV contraction); tiny at these sizes.
    x_pad = jnp.pad(x, ((0, 0), (0, 0), (0, C_PAD - C)))

    return pl.pallas_call(
        multihead_kernel,
        out_shape=jax.ShapeDtypeStruct((B, T, C), x.dtype),
        grid=(1,),                      # whole problem in one step (see header comment)
        in_specs=[
            pl.BlockSpec((B, T, C_PAD), lambda i: (0, 0, 0)),
            pl.BlockSpec((C_PAD, 3 * NUM_HEAD * HS_PAD), lambda i: (0, 0)),
            pl.BlockSpec((C_PAD, C), lambda i: (0, 0)),
            pl.BlockSpec((1, C), lambda i: (0, 0)),
        ],
        out_specs=pl.BlockSpec((B, T, C), lambda i: (0, 0, 0)),
        compiler_params=pltpu.CompilerParams(
            dimension_semantics=("arbitrary",)),
    )(x_pad, wqkv, wo_packed, bo)


def reference_forward(x, wq, wk, wv, wo, bo):
    """Plain-JAX reference matching the PyTorch semantics (full f32 precision)."""
    hp = jax.lax.Precision.HIGHEST
    B, T, C = x.shape
    scale = C ** (-0.5)
    mask = jnp.tril(jnp.ones((T, T), dtype=bool))
    head_outs = []
    for h in range(NUM_HEAD):
        q = jnp.matmul(x, wq[h], precision=hp)
        k = jnp.matmul(x, wk[h], precision=hp)
        v = jnp.matmul(x, wv[h], precision=hp)
        wei = jnp.matmul(q, jnp.swapaxes(k, -1, -2), precision=hp) * scale
        wei = jnp.where(mask, wei, -jnp.inf)
        wei = jax.nn.softmax(wei, axis=-1)
        head_outs.append(jnp.matmul(wei, v, precision=hp))
    cat = jnp.concatenate(head_outs, axis=-1)
    return jnp.matmul(cat, wo, precision=hp) + bo


if __name__ == "__main__":
    key = jax.random.PRNGKey(0)
    kx, kq, kk, kv, kw, kb = jax.random.split(key, 6)

    B, T, C = 2, 8, EMBED_DIM          # T <= block_size (32)

    x = jax.random.normal(kx, (B, T, C), dtype=jnp.float32)

    # Deterministic synthetic parameters (pre-transposed layout: x @ W).
    wq = jax.random.normal(kq, (NUM_HEAD, C, HEAD_SIZE), dtype=jnp.float32) * 0.1
    wk = jax.random.normal(kk, (NUM_HEAD, C, HEAD_SIZE), dtype=jnp.float32) * 0.1
    wv = jax.random.normal(kv, (NUM_HEAD, C, HEAD_SIZE), dtype=jnp.float32) * 0.1
    wo = jax.random.normal(kw, (C, C), dtype=jnp.float32) * 0.1
    bo = jax.random.normal(kb, (1, C), dtype=jnp.float32) * 0.1

    wqkv, wo_packed, bo_packed = pack_params(wq, wk, wv, wo, bo)

    out = multihead_forward(x, wqkv, wo_packed, bo_packed)
    out = jax.block_until_ready(out)

    ref = reference_forward(x, wq, wk, wv, wo, bo)
    assert out.shape == (B, T, C)
    # Both sides are full-f32 with exact softmax normalization; expected diff ~1e-5.
    assert jnp.allclose(out, ref, atol=2e-3, rtol=2e-3), "mismatch vs reference"

    print("KERNEL_OK")
</pallas_src>

<mosaic_0001>
module attributes {stable_mosaic.version = 11 : i64} {
  func.func @multihead_kernel(%arg0: i32, %arg1: memref<2x8x128xf32, #tpu.memory_space<vmem>>, %arg2: memref<128x384xf32, #tpu.memory_space<vmem>>, %arg3: memref<128x100xf32, #tpu.memory_space<vmem>>, %arg4: memref<1x100xf32, #tpu.memory_space<vmem>>, %arg5: memref<2x8x100xf32, #tpu.memory_space<vmem>>) attributes {dimension_semantics = [#tpu.dimension_semantics<arbitrary>], iteration_bounds = array<i64: 1>, scalar_prefetch = 0 : i64, scratch_operands = 0 : i64, tpu.core_type = #tpu.core_type<tc>, window_params = [{pipeline_mode = #tpu.pipeline_mode<synchronous>, transform_indices = @transform_0, window_bounds = array<i64: 2, 8, 128>}, {pipeline_mode = #tpu.pipeline_mode<synchronous>, transform_indices = @transform_1, window_bounds = array<i64: 128, 384>}, {pipeline_mode = #tpu.pipeline_mode<synchronous>, transform_indices = @transform_2, window_bounds = array<i64: 128, 100>}, {pipeline_mode = #tpu.pipeline_mode<synchronous>, transform_indices = @transform_3, window_bounds = array<i64: 1, 100>}, {pipeline_mode = #tpu.pipeline_mode<synchronous>, transform_indices = @transform_4, window_bounds = array<i64: 2, 8, 100>}]} {
    %c0 = arith.constant 0 : index
    %c0_0 = arith.constant 0 : index
    %c0_1 = arith.constant 0 : index
    %0 = vector.load %arg1[%c0, %c0_0, %c0_1] : memref<2x8x128xf32, #tpu.memory_space<vmem>>, vector<2x8x128xf32>
    %1 = vector.shape_cast %0 : vector<2x8x128xf32> to vector<16x128xf32>
    %c0_2 = arith.constant 0 : index
    %c0_3 = arith.constant 0 : index
    %2 = vector.load %arg2[%c0_2, %c0_3] : memref<128x384xf32, #tpu.memory_space<vmem>>, vector<128x384xf32>
    %cst = arith.constant dense<0.000000e+00> : vector<16x384xf32>
    %3 = tpu.matmul %1, %2, %cst {dimension_numbers = #tpu.dot_dimension_numbers<[1], [0], [0], [1], [0, 0, 1, 1], [], []>} : vector<16x128xf32>, vector<128x384xf32>, vector<16x384xf32> -> vector<16x384xf32>
    %4 = vector.shape_cast %3 : vector<16x384xf32> to vector<2x8x384xf32>
    %5 = tpu.iota {dimensions = array<i32: 0>} : vector<8x8xi32>
    %6 = tpu.iota {dimensions = array<i32: 1>} : vector<8x8xi32>
    %7 = arith.cmpi sle, %6, %5 : vector<8x8xi32>
    %8 = vector.shape_cast %7 : vector<8x8xi1> to vector<1x8x8xi1>
    %cst_4 = arith.constant 0.000000e+00 : f32
    %9 = vector.broadcast %cst_4 : f32 to vector<16x100xf32>
    %10 = vector.extract_strided_slice %4 {offsets = [0, 0, 0], sizes = [2, 8, 32], strides = [1, 1, 1]} : vector<2x8x384xf32> to vector<2x8x32xf32>
    %11 = vector.extract_strided_slice %4 {offsets = [0, 0, 128], sizes = [2, 8, 32], strides = [1, 1, 1]} : vector<2x8x384xf32> to vector<2x8x32xf32>
    %12 = vector.extract_strided_slice %4 {offsets = [0, 0, 256], sizes = [2, 8, 32], strides = [1, 1, 1]} : vector<2x8x384xf32> to vector<2x8x32xf32>
    %cst_5 = arith.constant dense<0.000000e+00> : vector<2x8x8xf32>
    %13 = tpu.matmul %10, %11, %cst_5 {dimension_numbers = #tpu.dot_dimension_numbers<[2], [2], [1], [1], [0, 0, 0, 1, 1, 1], [0], [0]>} : vector<2x8x32xf32>, vector<2x8x32xf32>, vector<2x8x8xf32> -> vector<2x8x8xf32>
    %cst_6 = arith.constant 1.000000e-01 : f32
    %14 = vector.broadcast %cst_6 : f32 to vector<2x8x8xf32>
    %15 = arith.mulf %13, %14 : vector<2x8x8xf32>
    %cst_7 = arith.constant 0xFF800000 : f32
    %16 = vector.shape_cast %8 : vector<1x8x8xi1> to vector<1x8x8xi1>
    %17 = vector.broadcast %16 : vector<1x8x8xi1> to vector<2x8x8xi1>
    %18 = vector.broadcast %cst_7 : f32 to vector<2x8x8xf32>
    %19 = arith.select %17, %15, %18 : vector<2x8x8xi1>, vector<2x8x8xf32>
    %cst_8 = arith.constant dense<0xFF800000> : vector<2x8xf32>
    %20 = vector.multi_reduction <maximumf>, %19, %cst_8 [2] : vector<2x8x8xf32> to vector<2x8xf32>
    %21 = vector.shape_cast %20 : vector<2x8xf32> to vector<2x8x1xf32>
    %22 = vector.broadcast %21 : vector<2x8x1xf32> to vector<2x8x8xf32>
    %23 = arith.subf %19, %22 : vector<2x8x8xf32>
    %24 = math.exp %23 : vector<2x8x8xf32>
    %cst_9 = arith.constant dense<0.000000e+00> : vector<2x8xf32>
    %25 = vector.multi_reduction <add>, %24, %cst_9 [2] : vector<2x8x8xf32> to vector<2x8xf32>
    %26 = vector.shape_cast %25 : vector<2x8xf32> to vector<2x8x1xf32>
    %27 = tpu.reciprocal %26 : vector<2x8x1xf32> -> vector<2x8x1xf32>
    %28 = vector.broadcast %27 : vector<2x8x1xf32> to vector<2x8x8xf32>
    %29 = arith.mulf %24, %28 : vector<2x8x8xf32>
    %cst_10 = arith.constant dense<0.000000e+00> : vector<2x8x32xf32>
    %30 = tpu.matmul %29, %12, %cst_10 {dimension_numbers = #tpu.dot_dimension_numbers<[2], [1], [1], [2], [0, 0, 0, 1, 1, 2], [0], [0]>} : vector<2x8x8xf32>, vector<2x8x32xf32>, vector<2x8x32xf32> -> vector<2x8x32xf32>
    %31 = vector.shape_cast %30 : vector<2x8x32xf32> to vector<16x32xf32>
    %c0_11 = arith.constant 0 : index
    %c0_12 = arith.constant 0 : index
    %32 = vector.load %arg3[%c0_11, %c0_12] : memref<128x100xf32, #tpu.memory_space<vmem>>, vector<32x100xf32>
    %cst_13 = arith.constant dense<0.000000e+00> : vector<16x100xf32>
    %33 = tpu.matmul %31, %32, %cst_13 {dimension_numbers = #tpu.dot_dimension_numbers<[1], [0], [0], [1], [0, 0, 1, 1], [], []>} : vector<16x32xf32>, vector<32x100xf32>, vector<16x100xf32> -> vector<16x100xf32>
    %34 = arith.addf %9, %33 : vector<16x100xf32>
    %35 = vector.extract_strided_slice %4 {offsets = [0, 0, 32], sizes = [2, 8, 32], strides = [1, 1, 1]} : vector<2x8x384xf32> to vector<2x8x32xf32>
    %36 = vector.extract_strided_slice %4 {offsets = [0, 0, 160], sizes = [2, 8, 32], strides = [1, 1, 1]} : vector<2x8x384xf32> to vector<2x8x32xf32>
    %37 = vector.extract_strided_slice %4 {offsets = [0, 0, 288], sizes = [2, 8, 32], strides = [1, 1, 1]} : vector<2x8x384xf32> to vector<2x8x32xf32>
    %cst_14 = arith.constant dense<0.000000e+00> : vector<2x8x8xf32>
    %38 = tpu.matmul %35, %36, %cst_14 {dimension_numbers = #tpu.dot_dimension_numbers<[2], [2], [1], [1], [0, 0, 0, 1, 1, 1], [0], [0]>} : vector<2x8x32xf32>, vector<2x8x32xf32>, vector<2x8x8xf32> -> vector<2x8x8xf32>
    %cst_15 = arith.constant 1.000000e-01 : f32
    %39 = vector.broadcast %cst_15 : f32 to vector<2x8x8xf32>
    %40 = arith.mulf %38, %39 : vector<2x8x8xf32>
    %cst_16 = arith.constant 0xFF800000 : f32
    %41 = vector.shape_cast %8 : vector<1x8x8xi1> to vector<1x8x8xi1>
    %42 = vector.broadcast %41 : vector<1x8x8xi1> to vector<2x8x8xi1>
    %43 = vector.broadcast %cst_16 : f32 to vector<2x8x8xf32>
    %44 = arith.select %42, %40, %43 : vector<2x8x8xi1>, vector<2x8x8xf32>
    %cst_17 = arith.constant dense<0xFF800000> : vector<2x8xf32>
    %45 = vector.multi_reduction <maximumf>, %44, %cst_17 [2] : vector<2x8x8xf32> to vector<2x8xf32>
    %46 = vector.shape_cast %45 : vector<2x8xf32> to vector<2x8x1xf32>
    %47 = vector.broadcast %46 : vector<2x8x1xf32> to vector<2x8x8xf32>
    %48 = arith.subf %44, %47 : vector<2x8x8xf32>
    %49 = math.exp %48 : vector<2x8x8xf32>
    %cst_18 = arith.constant dense<0.000000e+00> : vector<2x8xf32>
    %50 = vector.multi_reduction <add>, %49, %cst_18 [2] : vector<2x8x8xf32> to vector<2x8xf32>
    %51 = vector.shape_cast %50 : vector<2x8xf32> to vector<2x8x1xf32>
    %52 = tpu.reciprocal %51 : vector<2x8x1xf32> -> vector<2x8x1xf32>
    %53 = vector.broadcast %52 : vector<2x8x1xf32> to vector<2x8x8xf32>
    %54 = arith.mulf %49, %53 : vector<2x8x8xf32>
    %cst_19 = arith.constant dense<0.000000e+00> : vector<2x8x32xf32>
    %55 = tpu.matmul %54, %37, %cst_19 {dimension_numbers = #tpu.dot_dimension_numbers<[2], [1], [1], [2], [0, 0, 0, 1, 1, 2], [0], [0]>} : vector<2x8x8xf32>, vector<2x8x32xf32>, vector<2x8x32xf32> -> vector<2x8x32xf32>
    %56 = vector.shape_cast %55 : vector<2x8x32xf32> to vector<16x32xf32>
    %c32 = arith.constant 32 : index
    %c0_20 = arith.constant 0 : index
    %57 = vector.load %arg3[%c32, %c0_20] : memref<128x100xf32, #tpu.memory_space<vmem>>, vector<32x100xf32>
    %cst_21 = arith.constant dense<0.000000e+00> : vector<16x100xf32>
    %58 = tpu.matmul %56, %57, %cst_21 {dimension_numbers = #tpu.dot_dimension_numbers<[1], [0], [0], [1], [0, 0, 1, 1], [], []>} : vector<16x32xf32>, vector<32x100xf32>, vector<16x100xf32> -> vector<16x100xf32>
    %59 = arith.addf %34, %58 : vector<16x100xf32>
    %60 = vector.extract_strided_slice %4 {offsets = [0, 0, 64], sizes = [2, 8, 32], strides = [1, 1, 1]} : vector<2x8x384xf32> to vector<2x8x32xf32>
    %61 = vector.extract_strided_slice %4 {offsets = [0, 0, 192], sizes = [2, 8, 32], strides = [1, 1, 1]} : vector<2x8x384xf32> to vector<2x8x32xf32>
    %62 = vector.extract_strided_slice %4 {offsets = [0, 0, 320], sizes = [2, 8, 32], strides = [1, 1, 1]} : vector<2x8x384xf32> to vector<2x8x32xf32>
    %cst_22 = arith.constant dense<0.000000e+00> : vector<2x8x8xf32>
    %63 = tpu.matmul %60, %61, %cst_22 {dimension_numbers = #tpu.dot_dimension_numbers<[2], [2], [1], [1], [0, 0, 0, 1, 1, 1], [0], [0]>} : vector<2x8x32xf32>, vector<2x8x32xf32>, vector<2x8x8xf32> -> vector<2x8x8xf32>
    %cst_23 = arith.constant 1.000000e-01 : f32
    %64 = vector.broadcast %cst_23 : f32 to vector<2x8x8xf32>
    %65 = arith.mulf %63, %64 : vector<2x8x8xf32>
    %cst_24 = arith.constant 0xFF800000 : f32
    %66 = vector.shape_cast %8 : vector<1x8x8xi1> to vector<1x8x8xi1>
    %67 = vector.broadcast %66 : vector<1x8x8xi1> to vector<2x8x8xi1>
    %68 = vector.broadcast %cst_24 : f32 to vector<2x8x8xf32>
    %69 = arith.select %67, %65, %68 : vector<2x8x8xi1>, vector<2x8x8xf32>
    %cst_25 = arith.constant dense<0xFF800000> : vector<2x8xf32>
    %70 = vector.multi_reduction <maximumf>, %69, %cst_25 [2] : vector<2x8x8xf32> to vector<2x8xf32>
    %71 = vector.shape_cast %70 : vector<2x8xf32> to vector<2x8x1xf32>
    %72 = vector.broadcast %71 : vector<2x8x1xf32> to vector<2x8x8xf32>
    %73 = arith.subf %69, %72 : vector<2x8x8xf32>
    %74 = math.exp %73 : vector<2x8x8xf32>
    %cst_26 = arith.constant dense<0.000000e+00> : vector<2x8xf32>
    %75 = vector.multi_reduction <add>, %74, %cst_26 [2] : vector<2x8x8xf32> to vector<2x8xf32>
    %76 = vector.shape_cast %75 : vector<2x8xf32> to vector<2x8x1xf32>
    %77 = tpu.reciprocal %76 : vector<2x8x1xf32> -> vector<2x8x1xf32>
    %78 = vector.broadcast %77 : vector<2x8x1xf32> to vector<2x8x8xf32>
    %79 = arith.mulf %74, %78 : vector<2x8x8xf32>
    %cst_27 = arith.constant dense<0.000000e+00> : vector<2x8x32xf32>
    %80 = tpu.matmul %79, %62, %cst_27 {dimension_numbers = #tpu.dot_dimension_numbers<[2], [1], [1], [2], [0, 0, 0, 1, 1, 2], [0], [0]>} : vector<2x8x8xf32>, vector<2x8x32xf32>, vector<2x8x32xf32> -> vector<2x8x32xf32>
    %81 = vector.shape_cast %80 : vector<2x8x32xf32> to vector<16x32xf32>
    %c64 = arith.constant 64 : index
    %c0_28 = arith.constant 0 : index
    %82 = vector.load %arg3[%c64, %c0_28] : memref<128x100xf32, #tpu.memory_space<vmem>>, vector<32x100xf32>
    %cst_29 = arith.constant dense<0.000000e+00> : vector<16x100xf32>
    %83 = tpu.matmul %81, %82, %cst_29 {dimension_numbers = #tpu.dot_dimension_numbers<[1], [0], [0], [1], [0, 0, 1, 1], [], []>} : vector<16x32xf32>, vector<32x100xf32>, vector<16x100xf32> -> vector<16x100xf32>
    %84 = arith.addf %59, %83 : vector<16x100xf32>
    %85 = vector.extract_strided_slice %4 {offsets = [0, 0, 96], sizes = [2, 8, 32], strides = [1, 1, 1]} : vector<2x8x384xf32> to vector<2x8x32xf32>
    %86 = vector.extract_strided_slice %4 {offsets = [0, 0, 224], sizes = [2, 8, 32], strides = [1, 1, 1]} : vector<2x8x384xf32> to vector<2x8x32xf32>
    %87 = vector.extract_strided_slice %4 {offsets = [0, 0, 352], sizes = [2, 8, 32], strides = [1, 1, 1]} : vector<2x8x384xf32> to vector<2x8x32xf32>
    %cst_30 = arith.constant dense<0.000000e+00> : vector<2x8x8xf32>
    %88 = tpu.matmul %85, %86, %cst_30 {dimension_numbers = #tpu.dot_dimension_numbers<[2], [2], [1], [1], [0, 0, 0, 1, 1, 1], [0], [0]>} : vector<2x8x32xf32>, vector<2x8x32xf32>, vector<2x8x8xf32> -> vector<2x8x8xf32>
    %cst_31 = arith.constant 1.000000e-01 : f32
    %89 = vector.broadcast %cst_31 : f32 to vector<2x8x8xf32>
    %90 = arith.mulf %88, %89 : vector<2x8x8xf32>
    %cst_32 = arith.constant 0xFF800000 : f32
    %91 = vector.shape_cast %8 : vector<1x8x8xi1> to vector<1x8x8xi1>
    %92 = vector.broadcast %91 : vector<1x8x8xi1> to vector<2x8x8xi1>
    %93 = vector.broadcast %cst_32 : f32 to vector<2x8x8xf32>
    %94 = arith.select %92, %90, %93 : vector<2x8x8xi1>, vector<2x8x8xf32>
    %cst_33 = arith.constant dense<0xFF800000> : vector<2x8xf32>
    %95 = vector.multi_reduction <maximumf>, %94, %cst_33 [2] : vector<2x8x8xf32> to vector<2x8xf32>
    %96 = vector.shape_cast %95 : vector<2x8xf32> to vector<2x8x1xf32>
    %97 = vector.broadcast %96 : vector<2x8x1xf32> to vector<2x8x8xf32>
    %98 = arith.subf %94, %97 : vector<2x8x8xf32>
    %99 = math.exp %98 : vector<2x8x8xf32>
    %cst_34 = arith.constant dense<0.000000e+00> : vector<2x8xf32>
    %100 = vector.multi_reduction <add>, %99, %cst_34 [2] : vector<2x8x8xf32> to vector<2x8xf32>
    %101 = vector.shape_cast %100 : vector<2x8xf32> to vector<2x8x1xf32>
    %102 = tpu.reciprocal %101 : vector<2x8x1xf32> -> vector<2x8x1xf32>
    %103 = vector.broadcast %102 : vector<2x8x1xf32> to vector<2x8x8xf32>
    %104 = arith.mulf %99, %103 : vector<2x8x8xf32>
    %cst_35 = arith.constant dense<0.000000e+00> : vector<2x8x32xf32>
    %105 = tpu.matmul %104, %87, %cst_35 {dimension_numbers = #tpu.dot_dimension_numbers<[2], [1], [1], [2], [0, 0, 0, 1, 1, 2], [0], [0]>} : vector<2x8x8xf32>, vector<2x8x32xf32>, vector<2x8x32xf32> -> vector<2x8x32xf32>
    %106 = vector.shape_cast %105 : vector<2x8x32xf32> to vector<16x32xf32>
    %c96 = arith.constant 96 : index
    %c0_36 = arith.constant 0 : index
    %107 = vector.load %arg3[%c96, %c0_36] : memref<128x100xf32, #tpu.memory_space<vmem>>, vector<32x100xf32>
    %cst_37 = arith.constant dense<0.000000e+00> : vector<16x100xf32>
    %108 = tpu.matmul %106, %107, %cst_37 {dimension_numbers = #tpu.dot_dimension_numbers<[1], [0], [0], [1], [0, 0, 1, 1], [], []>} : vector<16x32xf32>, vector<32x100xf32>, vector<16x100xf32> -> vector<16x100xf32>
    %109 = arith.addf %84, %108 : vector<16x100xf32>
    %c0_38 = arith.constant 0 : index
    %c0_39 = arith.constant 0 : index
    %110 = vector.load %arg4[%c0_38, %c0_39] : memref<1x100xf32, #tpu.memory_space<vmem>>, vector<1x100xf32>
    %111 = vector.broadcast %110 : vector<1x100xf32> to vector<16x100xf32>
    %112 = arith.addf %109, %111 : vector<16x100xf32>
    %113 = vector.shape_cast %112 : vector<16x100xf32> to vector<2x8x100xf32>
    %c0_40 = arith.constant 0 : index
    %c0_41 = arith.constant 0 : index
    %c0_42 = arith.constant 0 : index
    %114 = vector.load %arg5[%c0_40, %c0_41, %c0_42] : memref<2x8x100xf32, #tpu.memory_space<vmem>>, vector<2x8x100xf32>
    tpu.vector_store %arg5[%c0_40, %c0_41, %c0_42], %113 {strides = array<i32>} : memref<2x8x100xf32, #tpu.memory_space<vmem>>, vector<2x8x100xf32>,
    return
  }
  func.func @transform_0(%arg0: i32) -> (i32, i32, i32) {
    %c0_i32 = arith.constant 0 : i32
    %c0_i32_0 = arith.constant 0 : i32
    %c0_i32_1 = arith.constant 0 : i32
    %c0_i32_2 = arith.constant 0 : i32
    return %c0_i32, %c0_i32_0, %c0_i32_1 : i32, i32, i32
  }
  func.func @transform_1(%arg0: i32) -> (i32, i32) {
    %c0_i32 = arith.constant 0 : i32
    %c0_i32_0 = arith.constant 0 : i32
    %c0_i32_1 = arith.constant 0 : i32
    return %c0_i32, %c0_i32_0 : i32, i32
  }
  func.func @transform_2(%arg0: i32) -> (i32, i32) {
    %c0_i32 = arith.constant 0 : i32
    %c0_i32_0 = arith.constant 0 : i32
    %c0_i32_1 = arith.constant 0 : i32
    return %c0_i32, %c0_i32_0 : i32, i32
  }
  func.func @transform_3(%arg0: i32) -> (i32, i32) {
    %c0_i32 = arith.constant 0 : i32
    %c0_i32_0 = arith.constant 0 : i32
    %c0_i32_1 = arith.constant 0 : i32
    return %c0_i32, %c0_i32_0 : i32, i32
  }
  func.func @transform_4(%arg0: i32) -> (i32, i32, i32) {
    %c0_i32 = arith.constant 0 : i32
    %c0_i32_0 = arith.constant 0 : i32
    %c0_i32_1 = arith.constant 0 : i32
    %c0_i32_2 = arith.constant 0 : i32
    return %c0_i32, %c0_i32_0, %c0_i32_1 : i32, i32, i32
  }
}

</mosaic_0001>

<llo_original>
// kernel: tpu_custom_call.1
$region0: #{tpu_custom_call.1}
  #allocation0 [shape = 'u32[]', space=smem, size = 0x4, offset = 0x4, fixed_abs, tag = 'smem constant byte address 0x4 - core index']
  #allocation1 [shape = 'u32[144,128]{1,0:T(1,128)}', space=vmem, size = 0x12000, scoped, tag = 'internal scratch']
  %s0 = inlined_call_operand.vmem [shape: f32[2,8,128], index: 0, kind: input, shape index: {}]
  %s1 = inlined_call_operand.hbm [shape: f32[128,384], index: 1, kind: input, shape index: {}]
  %s2 = inlined_call_operand.vmem [shape: f32[128,100], index: 2, kind: input, shape index: {}]
  %s3 = inlined_call_operand.vmem [shape: f32[1,100], index: 3, kind: input, shape index: {}]
  %s4 = inlined_call_operand.hbm [shape: f32[2,8,100], index: 4, kind: output, shape index: {}]
  %s5 = sld [smem:[#allocation0]]
  $region30: #{tpu_custom_call.1} parent=0
    _
  %s7 = ssub.s32 1, %s5
  %s8 = scalar_select 0, %s7, %s5
  $region1: #{tpu_custom_call.1} parent=0
    #allocation2 [shape = 'u8[196608]{0}', space=vmem, size = 0x30000, scoped, tag = 'input window, operand 1, single buffered']
    #allocation3 [shape = 's32[1]{0}', space=sflag, size = 0x4, scoped, tag = 'scoped memory for tpu_custom_call.1']
    #allocation4 [shape = 's32[1]{0}', space=sflag, size = 0x4, scoped, tag = 'scoped memory for tpu_custom_call.1']
    #allocation5 [shape = 'u8[8192]{0}', space=vmem, size = 0x2000, scoped, tag = 'output window, operand 0, single buffered']
    %9 = vsyncpa [#allocation3], 0
    %10 = vsyncpa [#allocation4], 0
    // Predicated region
    $region2: #{tpu_custom_call.1} parent=1 // pred_check
      _
    $region3: #{tpu_custom_call.1} parent=1 // pred_check_branch
      %12 = sbr.rel (0) target = $region5
    $region4: #{tpu_custom_call.1} parent=1 // pred_region
      _
    $region5: #{tpu_custom_call.1} parent=1 // pred_fallthru
      _
    // Predicated region
    $region6: #{tpu_custom_call.1} parent=1 // pred_check
      _
    $region7: #{tpu_custom_call.1} parent=1 // pred_check_branch
      %14 = sbr.rel (0) target = $region9
    $region8: #{tpu_custom_call.1} parent=1 // pred_region
      %s16 = ssub.s32 6144, 6144
      %17 = vsyncadd [#allocation3], %s16
      %s18 = sshll.u32 [#allocation2], 4
      %s19 = int_to_ptr.vmem [resolvable:$true] %s18
      %24 = dma.hbm_to_vmem [thread:$0]  %s1, 6144, %s19, [#allocation3], 384, 384, 24
    $region9: #{tpu_custom_call.1} parent=1 // pred_fallthru
      _
    // Predicated region
    $region10: #{tpu_custom_call.1} parent=1 // pred_check
      _
    $region11: #{tpu_custom_call.1} parent=1 // pred_check_branch
      %26 = sbr.rel (0) target = $region13
    $region12: #{tpu_custom_call.1} parent=1 // pred_region
      _
    $region13: #{tpu_custom_call.1} parent=1 // pred_fallthru
      _
    // Predicated region
    $region14: #{tpu_custom_call.1} parent=1 // pred_check
      _
    $region15: #{tpu_custom_call.1} parent=1 // pred_check_branch
      %28 = sbr.rel (0) target = $region17
    $region16: #{tpu_custom_call.1} parent=1 // pred_region
      _
    $region17: #{tpu_custom_call.1} parent=1 // pred_fallthru
      _
    // Predicated region
    $region18: #{tpu_custom_call.1} parent=1 // pred_check
      _
    $region19: #{tpu_custom_call.1} parent=1 // pred_check_branch
      %30 = sbr.rel (0) target = $region21
    $region20: #{tpu_custom_call.1} parent=1 // pred_region
      %31 = dma.done [#allocation3], 6144
    $region21: #{tpu_custom_call.1} parent=1 // pred_fallthru
      _
    %v32 = vld [vmem:[%s0] sm:$0xff]
    %v33 = vld [vmem:[%s0 + $0x8] sm:$0xff]
    %v34 = vld [vmem:[#allocation2] sm:$0xff]
    %v35 = vld [vmem:[#allocation2 + $0x8] sm:$0xff]
    %v36 = vld [vmem:[#allocation2 + $0x10] sm:$0xff]
    %v37 = vld [vmem:[#allocation2 + $0x18] sm:$0xff]
    %v38 = vld [vmem:[#allocation2 + $0x20] sm:$0xff]
    %v39 = vld [vmem:[#allocation2 + $0x28] sm:$0xff]
    %v40 = vld [vmem:[#allocation2 + $0x30] sm:$0xff]
    %v41 = vld [vmem:[#allocation2 + $0x38] sm:$0xff]
    %v42 = vld [vmem:[#allocation2 + $0x40] sm:$0xff]
    %v43 = vld [vmem:[#allocation2 + $0x48] sm:$0xff]
    %v44 = vld [vmem:[#allocation2 + $0x50] sm:$0xff]
    %v45 = vld [vmem:[#allocation2 + $0x58] sm:$0xff]
    %v46 = vld [vmem:[#allocation2 + $0x60] sm:$0xff]
    %v47 = vld [vmem:[#allocation2 + $0x68] sm:$0xff]
    %v48 = vld [vmem:[#allocation2 + $0x70] sm:$0xff]
    %v49 = vld [vmem:[#allocation2 + $0x78] sm:$0xff]
    %v50 = vld [vmem:[#allocation2 + $0x80] sm:$0xff]
    %v51 = vld [vmem:[#allocation2 + $0x88] sm:$0xff]
    %v52 = vld [vmem:[#allocation2 + $0x90] sm:$0xff]
    %v53 = vld [vmem:[#allocation2 + $0x98] sm:$0xff]
    %v54 = vld [vmem:[#allocation2 + $0xa0] sm:$0xff]
    %v55 = vld [vmem:[#allocation2 + $0xa8] sm:$0xff]
    %v56 = vld [vmem:[#allocation2 + $0xb0] sm:$0xff]
    %v57 = vld [vmem:[#allocation2 + $0xb8] sm:$0xff]
    %v58 = vld [vmem:[#allocation2 + $0xc0] sm:$0xff]
    %v59 = vld [vmem:[#allocation2 + $0xc8] sm:$0xff]
    %v60 = vld [vmem:[#allocation2 + $0xd0] sm:$0xff]
    %v61 = vld [vmem:[#allocation2 + $0xd8] sm:$0xff]
    %v62 = vld [vmem:[#allocation2 + $0xe0] sm:$0xff]
    %v63 = vld [vmem:[#allocation2 + $0xe8] sm:$0xff]
    %v64 = vld [vmem:[#allocation2 + $0xf0] sm:$0xff]
    %v65 = vld [vmem:[#allocation2 + $0xf8] sm:$0xff]
    %v66 = vld [vmem:[#allocation2 + $0x100] sm:$0xff]
    %v67 = vld [vmem:[#allocation2 + $0x108] sm:$0xff]
    %v68 = vld [vmem:[#allocation2 + $0x110] sm:$0xff]
    %v69 = vld [vmem:[#allocation2 + $0x118] sm:$0xff]
    %v70 = vld [vmem:[#allocation2 + $0x120] sm:$0xff]
    %v71 = vld [vmem:[#allocation2 + $0x128] sm:$0xff]
    %v72 = vld [vmem:[#allocation2 + $0x130] sm:$0xff]
    %v73 = vld [vmem:[#allocation2 + $0x138] sm:$0xff]
    %v74 = vld [vmem:[#allocation2 + $0x140] sm:$0xff]
    %v75 = vld [vmem:[#allocation2 + $0x148] sm:$0xff]
    %v76 = vld [vmem:[#allocation2 + $0x150] sm:$0xff]
    %v77 = vld [vmem:[#allocation2 + $0x158] sm:$0xff]
    %v78 = vld [vmem:[#allocation2 + $0x160] sm:$0xff]
    %v79 = vld [vmem:[#allocation2 + $0x168] sm:$0xff]
    %v80 = vld [vmem:[#allocation2 + $0x170] sm:$0xff]
    %v81 = vld [vmem:[#allocation2 + $0x178] sm:$0xff]
    %82 = vmatprep.subr.mxu0 %v35
    %83 = vmatpush1.msra.mxu0 %v34
    %84 = vmatprep.subr.mxu0 %v38
    %85 = vmatpush1.msra.mxu0 %v37
    %86 = vmatprep.subr.mxu0 %v41
    %87 = vmatpush1.msra.mxu0 %v40
    %88 = vmatprep.subr.mxu0 %v44
    %89 = vmatpush1.msra.mxu0 %v43
    %90 = vmatprep.subr.mxu0 %v47
    %91 = vmatpush1.msra.mxu0 %v46
    %92 = vmatprep.subr.mxu0 %v50
    %93 = vmatpush1.msra.mxu0 %v49
    %94 = vmatprep.subr.mxu0 %v53
    %95 = vmatpush1.msra.mxu0 %v52
    %96 = vmatprep.subr.mxu0 %v56
    %97 = vmatpush1.msra.mxu0 %v55
    %98 = vmatprep.subr.mxu0 %v59
    %99 = vmatpush1.msra.mxu0 %v58
    %100 = vmatprep.subr.mxu0 %v62
    %101 = vmatpush1.msra.mxu0 %v61
    %102 = vmatprep.subr.mxu0 %v65
    %103 = vmatpush1.msra.mxu0 %v64
    %104 = vmatprep.subr.mxu0 %v68
    %105 = vmatpush1.msra.mxu0 %v67
    %106 = vmatprep.subr.mxu0 %v71
    %107 = vmatpush1.msra.mxu0 %v70
    %108 = vmatprep.subr.mxu0 %v74
    %109 = vmatpush1.msra.mxu0 %v73
    %110 = vmatprep.subr.mxu0 %v77
    %111 = vmatpush1.msra.mxu0 %v76
    %112 = vmatprep.subr.mxu0 %v80
    %113 = vmatpush1.msra.mxu0 %v79
    %114 = vmatprep.subr.mxu0 0.0
    %115 = vmatpush1.msra.mxu0 0.0
    %116 = vmatprep.subr.mxu0 0.0
    %117 = vmatpush1.msra.mxu0 0.0
    %118 = vmatprep.subr.mxu0 0.0
    %119 = vmatpush1.msra.mxu0 0.0
    %120 = vmatprep.subr.mxu0 0.0
    %121 = vmatpush1.msra.mxu0 0.0
    %122 = vmatprep.subr.mxu0 0.0
    %123 = vmatpush1.msra.mxu0 0.0
    %124 = vmatprep.subr.mxu0 0.0
    %125 = vmatpush1.msra.mxu0 0.0
    %126 = vmatprep.subr.mxu0 0.0
    %127 = vmatpush1.msra.mxu0 0.0
    %128 = vmatprep.subr.mxu0 0.0
    %129 = vmatpush1.msra.mxu0 0.0
    %130 = vmatprep.subr.mxu0 0.0
    %131 = vmatpush1.msra.mxu0 0.0
    %132 = vmatprep.subr.mxu0 0.0
    %133 = vmatpush1.msra.mxu0 0.0
    %134 = vmatprep.subr.mxu0 0.0
    %135 = vmatpush1.msra.mxu0 0.0
    %136 = vmatprep.subr.mxu0 0.0
    %137 = vmatpush1.msra.mxu0 0.0
    %138 = vmatprep.subr.mxu0 0.0
    %139 = vmatpush1.msra.mxu0 0.0
    %140 = vmatprep.subr.mxu0 0.0
    %141 = vmatpush1.msra.mxu0 0.0
    %142 = vmatprep.subr.mxu0 0.0
    %143 = vmatpush1.msra.mxu0 0.0
    %144 = vmatprep.subr.mxu0 0.0
    %145 = vmatpush1.msra.mxu0 0.0
    %146 = vmatprep.mubr.f32.mxu0 0.0
    %147 = vmatmul.mubr.f32.gmra.mrb[0].mxu0 %v32
    %v148 = vpop.f32.mrb[0].mxu0
    %v149 = vadd.f32 0.0, %v148
    %v150 = vpop.f32.mrb[0].mxu0
    %v151 = vadd.f32 0.0, %v150
    %152 = vmatprep.mubr.f32.mxu0 0.0
    %153 = vmatmul.mubr.f32.gmra.mrb[0].mxu0 %v33
    %v154 = vpop.f32.mrb[0].mxu0
    %v155 = vadd.f32 0.0, %v154
    %v156 = vpop.f32.mrb[0].mxu0
    %v157 = vadd.f32 0.0, %v156
    %158 = vdwg.mxu0
    %159 = vmatprep.subr.mxu0 0.0
    %160 = vmatpush1.msra.mxu0 %v36
    %161 = vmatprep.subr.mxu0 0.0
    %162 = vmatpush1.msra.mxu0 %v39
    %163 = vmatprep.subr.mxu0 0.0
    %164 = vmatpush1.msra.mxu0 %v42
    %165 = vmatprep.subr.mxu0 0.0
    %166 = vmatpush1.msra.mxu0 %v45
    %167 = vmatprep.subr.mxu0 0.0
    %168 = vmatpush1.msra.mxu0 %v48
    %169 = vmatprep.subr.mxu0 0.0
    %170 = vmatpush1.msra.mxu0 %v51
    %171 = vmatprep.subr.mxu0 0.0
    %172 = vmatpush1.msra.mxu0 %v54
    %173 = vmatprep.subr.mxu0 0.0
    %174 = vmatpush1.msra.mxu0 %v57
    %175 = vmatprep.subr.mxu0 0.0
    %176 = vmatpush1.msra.mxu0 %v60
    %177 = vmatprep.subr.mxu0 0.0
    %178 = vmatpush1.msra.mxu0 %v63
    %179 = vmatprep.subr.mxu0 0.0
    %180 = vmatpush1.msra.mxu0 %v66
    %181 = vmatprep.subr.mxu0 0.0
    %182 = vmatpush1.msra.mxu0 %v69
    %183 = vmatprep.subr.mxu0 0.0
    %184 = vmatpush1.msra.mxu0 %v72
    %185 = vmatprep.subr.mxu0 0.0
    %186 = vmatpush1.msra.mxu0 %v75
    %187 = vmatprep.subr.mxu0 0.0
    %188 = vmatpush1.msra.mxu0 %v78
    %189 = vmatprep.subr.mxu0 0.0
    %190 = vmatpush1.msra.mxu0 %v81
    %191 = vmatprep.subr.mxu0 0.0
    %192 = vmatpush1.msra.mxu0 0.0
    %193 = vmatprep.subr.mxu0 0.0
    %194 = vmatpush1.msra.mxu0 0.0
    %195 = vmatprep.subr.mxu0 0.0
    %196 = vmatpush1.msra.mxu0 0.0
    %197 = vmatprep.subr.mxu0 0.0
    %198 = vmatpush1.msra.mxu0 0.0
    %199 = vmatprep.subr.mxu0 0.0
    %200 = vmatpush1.msra.mxu0 0.0
    %201 = vmatprep.subr.mxu0 0.0
    %202 = vmatpush1.msra.mxu0 0.0
    %203 = vmatprep.subr.mxu0 0.0
    %204 = vmatpush1.msra.mxu0 0.0
    %205 = vmatprep.subr.mxu0 0.0
    %206 = vmatpush1.msra.mxu0 0.0
    %207 = vmatprep.subr.mxu0 0.0
    %208 = vmatpush1.msra.mxu0 0.0
    %209 = vmatprep.subr.mxu0 0.0
    %210 = vmatpush1.msra.mxu0 0.0
    %211 = vmatprep.subr.mxu0 0.0
    %212 = vmatpush1.msra.mxu0 0.0
    %213 = vmatprep.subr.mxu0 0.0
    %214 = vmatpush1.msra.mxu0 0.0
    %215 = vmatprep.subr.mxu0 0.0
    %216 = vmatpush1.msra.mxu0 0.0
    %217 = vmatprep.subr.mxu0 0.0
    %218 = vmatpush1.msra.mxu0 0.0
    %219 = vmatprep.subr.mxu0 0.0
    %220 = vmatpush1.msra.mxu0 0.0
    %221 = vmatprep.subr.mxu0 0.0
    %222 = vmatpush1.msra.mxu0 0.0
    %223 = vmatprep.mubr.f32.mxu0 0.0
    %224 = vmatmul.mubr.f32.gmra.mrb[0].mxu0 %v32
    %v225 = vpop.f32.mrb[0].mxu0
    %v226 = vadd.f32 0.0, %v225
    %v227 = vpop.f32.mrb[0].mxu0
    %228 = vmatprep.mubr.f32.mxu0 0.0
    %229 = vmatmul.mubr.f32.gmra.mrb[0].mxu0 %v33
    %v230 = vpop.f32.mrb[0].mxu0
    %v231 = vadd.f32 0.0, %v230
    %v232 = vpop.f32.mrb[0].mxu0
    %233 = vdwg.mxu0
    %v234 = vlaneseq
    %v235 = vshrl.u32 %v234, 7
    %v236 = vlaneseq
    %v237 = vand.u32 %v236, 127
    %vm238 = vcmp.le.s32.totalorder %v237, %v235
    %vm239 = vcmask 261120
    %v241 = vsel %vm239, %v149, 0
    %v244 = vsel %vm239, %v151, 0
    %246 = vmatprep.subr.mxu0 0.0
    %247 = vmatpush1.xpose.msra.mxu0 %v244
    %248 = vmatprep.subr.mxu0 0.0
    %249 = vmatpush1.xpose.msra.mxu0 0.0
    %250 = vmatprep.subr.mxu0 0.0
    %251 = vmatpush1.xpose.msra.mxu0 0.0
    %252 = vmatprep.subr.mxu0 0.0
    %253 = vmatpush1.xpose.msra.mxu0 0.0
    %254 = vmatprep.subr.mxu0 0.0
    %255 = vmatpush1.xpose.msra.mxu0 0.0
    %256 = vmatprep.subr.mxu0 0.0
    %257 = vmatpush1.xpose.msra.mxu0 0.0
    %258 = vmatprep.subr.mxu0 0.0
    %259 = vmatpush1.xpose.msra.mxu0 0.0
    %260 = vmatprep.subr.mxu0 0.0
    %261 = vmatpush1.xpose.msra.mxu0 0.0
    %262 = vmatprep.subr.mxu0 0.0
    %263 = vmatpush1.xpose.msra.mxu0 0.0
    %264 = vmatprep.subr.mxu0 0.0
    %265 = vmatpush1.xpose.msra.mxu0 0.0
    %266 = vmatprep.subr.mxu0 0.0
    %267 = vmatpush1.xpose.msra.mxu0 0.0
    %268 = vmatprep.subr.mxu0 0.0
    %269 = vmatpush1.xpose.msra.mxu0 0.0
    %270 = vmatprep.subr.mxu0 0.0
    %271 = vmatpush1.xpose.msra.mxu0 0.0
    %272 = vmatprep.subr.mxu0 0.0
    %273 = vmatpush1.xpose.msra.mxu0 0.0
    %274 = vmatprep.subr.mxu0 0.0
    %275 = vmatpush1.xpose.msra.mxu0 0.0
    %276 = vmatprep.subr.mxu0 0.0
    %277 = vmatpush1.xpose.msra.mxu0 0.0
    %278 = vmatprep.subr.mxu0 0.0
    %279 = vmatpush1.xpose.msra.mxu0 0.0
    %280 = vmatprep.subr.mxu0 0.0
    %281 = vmatpush1.xpose.msra.mxu0 0.0
    %282 = vmatprep.subr.mxu0 0.0
    %283 = vmatpush1.xpose.msra.mxu0 0.0
    %284 = vmatprep.subr.mxu0 0.0
    %285 = vmatpush1.xpose.msra.mxu0 0.0
    %286 = vmatprep.subr.mxu0 0.0
    %287 = vmatpush1.xpose.msra.mxu0 0.0
    %288 = vmatprep.subr.mxu0 0.0
    %289 = vmatpush1.xpose.msra.mxu0 0.0
    %290 = vmatprep.subr.mxu0 0.0
    %291 = vmatpush1.xpose.msra.mxu0 0.0
    %292 = vmatprep.subr.mxu0 0.0
    %293 = vmatpush1.xpose.msra.mxu0 0.0
    %294 = vmatprep.subr.mxu0 0.0
    %295 = vmatpush1.xpose.msra.mxu0 0.0
    %296 = vmatprep.subr.mxu0 0.0
    %297 = vmatpush1.xpose.msra.mxu0 0.0
    %298 = vmatprep.subr.mxu0 0.0
    %299 = vmatpush1.xpose.msra.mxu0 0.0
    %300 = vmatprep.subr.mxu0 0.0
    %301 = vmatpush1.xpose.msra.mxu0 0.0
    %302 = vmatprep.subr.mxu0 0.0
    %303 = vmatpush1.xpose.msra.mxu0 0.0
    %304 = vmatprep.subr.mxu0 0.0
    %305 = vmatpush1.xpose.msra.mxu0 0.0
    %306 = vmatprep.subr.mxu0 0.0
    %307 = vmatpush1.xpose.msra.mxu0 0.0
    %308 = vmatprep.subr.mxu0 0.0
    %309 = vmatpush1.xpose.msra.mxu0 0.0
    %310 = vmatprep.mubr.f32.mxu0 0.0
    %311 = vmatmul.mubr.f32.gmra.mrb[0].mxu0 %v241
    %v312 = vpop.f32.mrb[0].mxu0
    %v313 = vadd.f32 0.0, %v312
    %v314 = vpop.f32.mrb[0].mxu0
    %315 = vdwg.mxu0
    %v317 = vsel %vm239, %v155, 0
    %v320 = vsel %vm239, %v157, 0
    %322 = vmatprep.subr.mxu0 0.0
    %323 = vmatpush1.xpose.msra.mxu0 %v320
    %324 = vmatprep.subr.mxu0 0.0
    %325 = vmatpush1.xpose.msra.mxu0 0.0
    %326 = vmatprep.subr.mxu0 0.0
    %327 = vmatpush1.xpose.msra.mxu0 0.0
    %328 = vmatprep.subr.mxu0 0.0
    %329 = vmatpush1.xpose.msra.mxu0 0.0
    %330 = vmatprep.subr.mxu0 0.0
    %331 = vmatpush1.xpose.msra.mxu0 0.0
    %332 = vmatprep.subr.mxu0 0.0
    %333 = vmatpush1.xpose.msra.mxu0 0.0
    %334 = vmatprep.subr.mxu0 0.0
    %335 = vmatpush1.xpose.msra.mxu0 0.0
    %336 = vmatprep.subr.mxu0 0.0
    %337 = vmatpush1.xpose.msra.mxu0 0.0
    %338 = vmatprep.subr.mxu0 0.0
    %339 = vmatpush1.xpose.msra.mxu0 0.0
    %340 = vmatprep.subr.mxu0 0.0
    %341 = vmatpush1.xpose.msra.mxu0 0.0
    %342 = vmatprep.subr.mxu0 0.0
    %343 = vmatpush1.xpose.msra.mxu0 0.0
    %344 = vmatprep.subr.mxu0 0.0
    %345 = vmatpush1.xpose.msra.mxu0 0.0
    %346 = vmatprep.subr.mxu0 0.0
    %347 = vmatpush1.xpose.msra.mxu0 0.0
    %348 = vmatprep.subr.mxu0 0.0
    %349 = vmatpush1.xpose.msra.mxu0 0.0
    %350 = vmatprep.subr.mxu0 0.0
    %351 = vmatpush1.xpose.msra.mxu0 0.0
    %352 = vmatprep.subr.mxu0 0.0
    %353 = vmatpush1.xpose.msra.mxu0 0.0
    %354 = vmatprep.subr.mxu0 0.0
    %355 = vmatpush1.xpose.msra.mxu0 0.0
    %356 = vmatprep.subr.mxu0 0.0
    %357 = vmatpush1.xpose.msra.mxu0 0.0
    %358 = vmatprep.subr.mxu0 0.0
    %359 = vmatpush1.xpose.msra.mxu0 0.0
    %360 = vmatprep.subr.mxu0 0.0
    %361 = vmatpush1.xpose.msra.mxu0 0.0
    %362 = vmatprep.subr.mxu0 0.0
    %363 = vmatpush1.xpose.msra.mxu0 0.0
    %364 = vmatprep.subr.mxu0 0.0
    %365 = vmatpush1.xpose.msra.mxu0 0.0
    %366 = vmatprep.subr.mxu0 0.0
    %367 = vmatpush1.xpose.msra.mxu0 0.0
    %368 = vmatprep.subr.mxu0 0.0
    %369 = vmatpush1.xpose.msra.mxu0 0.0
    %370 = vmatprep.subr.mxu0 0.0
    %371 = vmatpush1.xpose.msra.mxu0 0.0
    %372 = vmatprep.subr.mxu0 0.0
    %373 = vmatpush1.xpose.msra.mxu0 0.0
    %374 = vmatprep.subr.mxu0 0.0
    %375 = vmatpush1.xpose.msra.mxu0 0.0
    %376 = vmatprep.subr.mxu0 0.0
    %377 = vmatpush1.xpose.msra.mxu0 0.0
    %378 = vmatprep.subr.mxu0 0.0
    %379 = vmatpush1.xpose.msra.mxu0 0.0
    %380 = vmatprep.subr.mxu0 0.0
    %381 = vmatpush1.xpose.msra.mxu0 0.0
    %382 = vmatprep.subr.mxu0 0.0
    %383 = vmatpush1.xpose.msra.mxu0 0.0
    %384 = vmatprep.subr.mxu0 0.0
    %385 = vmatpush1.xpose.msra.mxu0 0.0
    %386 = vmatprep.mubr.f32.mxu0 0.0
    %387 = vmatmul.mubr.f32.gmra.mrb[0].mxu0 %v317
    %v388 = vpop.f32.mrb[0].mxu0
    %v389 = vadd.f32 0.0, %v388
    %v390 = vpop.f32.mrb[0].mxu0
    %391 = vdwg.mxu0
    %v392 = vmul.f32 %v313, 0.1
    %v393 = vmul.f32 %v389, 0.1
    %v394 = vsel %vm238, 1, 0
    %vm395 = vcmp.eq.s32.totalorder %v394, 1
    %v396 = vsel %vm395, %v392, -inf
    %v397 = vsel %vm395, %v393, -inf
    %vm398 = vcmask 64512
    %v399 = vsel %vm398, %v396, -inf
    %400 = vmax.xlane.f32.xlu0 %v399
    %v401 = vpop.xlane.xlu0 %400
    %v402 = vsel %vm398, %v397, -inf
    %403 = vmax.xlane.f32.xlu0 %v402
    %v404 = vpop.xlane.xlu0 %403
    %v405 = vsub.f32 %v396, %v401
    %v406 = vsub.f32 %v397, %v404
    %v407 = vmul.f32 %v405, 1.442695
    %v408 = vpow.pop %v407
    %v409 = vmul.f32 %v406, 1.442695
    %v410 = vpow.pop %v409
    %v411 = vsel %vm398, %v408, 0.0
    %412 = vadd.xlane.f32.xlu0 %v411
    %v413 = vpop.xlane.xlu0 %412
    %v414 = vsel %vm398, %v410, 0.0
    %415 = vadd.xlane.f32.xlu0 %v414
    %v416 = vpop.xlane.xlu0 %415
    %v417 = vrcp.pop %v413
    %v418 = vrcp.pop %v416
    %v419 = vmul.f32 %v408, %v417
    %v420 = vmul.f32 %v410, %v418
    %v422 = vsel %vm398, %v419, 0
    %424 = vmatprep.subr.mxu0 0.0
    %425 = vmatpush1.msra.mxu0 %v226
    %426 = vmatprep.subr.mxu0 0.0
    %427 = vmatpush1.msra.mxu0 0.0
    %428 = vmatprep.subr.mxu0 0.0
    %429 = vmatpush1.msra.mxu0 0.0
    %430 = vmatprep.subr.mxu0 0.0
    %431 = vmatpush1.msra.mxu0 0.0
    %432 = vmatprep.subr.mxu0 0.0
    %433 = vmatpush1.msra.mxu0 0.0
    %434 = vmatprep.subr.mxu0 0.0
    %435 = vmatpush1.msra.mxu0 0.0
    %436 = vmatprep.subr.mxu0 0.0
    %437 = vmatpush1.msra.mxu0 0.0
    %438 = vmatprep.subr.mxu0 0.0
    %439 = vmatpush1.msra.mxu0 0.0
    %440 = vmatprep.subr.mxu0 0.0
    %441 = vmatpush1.msra.mxu0 0.0
    %442 = vmatprep.subr.mxu0 0.0
    %443 = vmatpush1.msra.mxu0 0.0
    %444 = vmatprep.subr.mxu0 0.0
    %445 = vmatpush1.msra.mxu0 0.0
    %446 = vmatprep.subr.mxu0 0.0
    %447 = vmatpush1.msra.mxu0 0.0
    %448 = vmatprep.subr.mxu0 0.0
    %449 = vmatpush1.msra.mxu0 0.0
    %450 = vmatprep.subr.mxu0 0.0
    %451 = vmatpush1.msra.mxu0 0.0
    %452 = vmatprep.subr.mxu0 0.0
    %453 = vmatpush1.msra.mxu0 0.0
    %454 = vmatprep.subr.mxu0 0.0
    %455 = vmatpush1.msra.mxu0 0.0
    %456 = vmatprep.subr.mxu0 0.0
    %457 = vmatpush1.msra.mxu0 0.0
    %458 = vmatprep.subr.mxu0 0.0
    %459 = vmatpush1.msra.mxu0 0.0
    %460 = vmatprep.subr.mxu0 0.0
    %461 = vmatpush1.msra.mxu0 0.0
    %462 = vmatprep.subr.mxu0 0.0
    %463 = vmatpush1.msra.mxu0 0.0
    %464 = vmatprep.subr.mxu0 0.0
    %465 = vmatpush1.msra.mxu0 0.0
    %466 = vmatprep.subr.mxu0 0.0
    %467 = vmatpush1.msra.mxu0 0.0
    %468 = vmatprep.subr.mxu0 0.0
    %469 = vmatpush1.msra.mxu0 0.0
    %470 = vmatprep.subr.mxu0 0.0
    %471 = vmatpush1.msra.mxu0 0.0
    %472 = vmatprep.subr.mxu0 0.0
    %473 = vmatpush1.msra.mxu0 0.0
    %474 = vmatprep.subr.mxu0 0.0
    %475 = vmatpush1.msra.mxu0 0.0
    %476 = vmatprep.subr.mxu0 0.0
    %477 = vmatpush1.msra.mxu0 0.0
    %478 = vmatprep.subr.mxu0 0.0
    %479 = vmatpush1.msra.mxu0 0.0
    %480 = vmatprep.subr.mxu0 0.0
    %481 = vmatpush1.msra.mxu0 0.0
    %482 = vmatprep.subr.mxu0 0.0
    %483 = vmatpush1.msra.mxu0 0.0
    %484 = vmatprep.subr.mxu0 0.0
    %485 = vmatpush1.msra.mxu0 0.0
    %486 = vmatprep.subr.mxu0 0.0
    %487 = vmatpush1.msra.mxu0 0.0
    %488 = vmatprep.mubr.f32.mxu0 0.0
    %489 = vmatmul.mubr.f32.gmra.mrb[0].mxu0 %v422
    %v490 = vpop.f32.mrb[0].mxu0
    %v491 = vadd.f32 0.0, %v490
    %v492 = vpop.f32.mrb[0].mxu0
    %493 = vdwg.mxu0
    %v495 = vsel %vm398, %v420, 0
    %497 = vmatprep.subr.mxu0 0.0
    %498 = vmatpush1.msra.mxu0 %v231
    %499 = vmatprep.subr.mxu0 0.0
    %500 = vmatpush1.msra.mxu0 0.0
    %501 = vmatprep.subr.mxu0 0.0
    %502 = vmatpush1.msra.mxu0 0.0
    %503 = vmatprep.subr.mxu0 0.0
    %504 = vmatpush1.msra.mxu0 0.0
    %505 = vmatprep.subr.mxu0 0.0
    %506 = vmatpush1.msra.mxu0 0.0
    %507 = vmatprep.subr.mxu0 0.0
    %508 = vmatpush1.msra.mxu0 0.0
    %509 = vmatprep.subr.mxu0 0.0
    %510 = vmatpush1.msra.mxu0 0.0
    %511 = vmatprep.subr.mxu0 0.0
    %512 = vmatpush1.msra.mxu0 0.0
    %513 = vmatprep.subr.mxu0 0.0
    %514 = vmatpush1.msra.mxu0 0.0
    %515 = vmatprep.subr.mxu0 0.0
    %516 = vmatpush1.msra.mxu0 0.0
    %517 = vmatprep.subr.mxu0 0.0
    %518 = vmatpush1.msra.mxu0 0.0
    %519 = vmatprep.subr.mxu0 0.0
    %520 = vmatpush1.msra.mxu0 0.0
    %521 = vmatprep.subr.mxu0 0.0
    %522 = vmatpush1.msra.mxu0 0.0
    %523 = vmatprep.subr.mxu0 0.0
    %524 = vmatpush1.msra.mxu0 0.0
    %525 = vmatprep.subr.mxu0 0.0
    %526 = vmatpush1.msra.mxu0 0.0
    %527 = vmatprep.subr.mxu0 0.0
    %528 = vmatpush1.msra.mxu0 0.0
    %529 = vmatprep.subr.mxu0 0.0
    %530 = vmatpush1.msra.mxu0 0.0
    %531 = vmatprep.subr.mxu0 0.0
    %532 = vmatpush1.msra.mxu0 0.0
    %533 = vmatprep.subr.mxu0 0.0
    %534 = vmatpush1.msra.mxu0 0.0
    %535 = vmatprep.subr.mxu0 0.0
    %536 = vmatpush1.msra.mxu0 0.0
    %537 = vmatprep.subr.mxu0 0.0
    %538 = vmatpush1.msra.mxu0 0.0
    %539 = vmatprep.subr.mxu0 0.0
    %540 = vmatpush1.msra.mxu0 0.0
    %541 = vmatprep.subr.mxu0 0.0
    %542 = vmatpush1.msra.mxu0 0.0
    %543 = vmatprep.subr.mxu0 0.0
    %544 = vmatpush1.msra.mxu0 0.0
    %545 = vmatprep.subr.mxu0 0.0
    %546 = vmatpush1.msra.mxu0 0.0
    %547 = vmatprep.subr.mxu0 0.0
    %548 = vmatpush1.msra.mxu0 0.0
    %549 = vmatprep.subr.mxu0 0.0
    %550 = vmatpush1.msra.mxu0 0.0
    %551 = vmatprep.subr.mxu0 0.0
    %552 = vmatpush1.msra.mxu0 0.0
    %553 = vmatprep.subr.mxu0 0.0
    %554 = vmatpush1.msra.mxu0 0.0
    %555 = vmatprep.subr.mxu0 0.0
    %556 = vmatpush1.msra.mxu0 0.0
    %557 = vmatprep.subr.mxu0 0.0
    %558 = vmatpush1.msra.mxu0 0.0
    %559 = vmatprep.subr.mxu0 0.0
    %560 = vmatpush1.msra.mxu0 0.0
    %561 = vmatprep.mubr.f32.mxu0 0.0
    %562 = vmatmul.mubr.f32.gmra.mrb[0].mxu0 %v495
    %v563 = vpop.f32.mrb[0].mxu0
    %v564 = vadd.f32 0.0, %v563
    %v565 = vpop.f32.mrb[0].mxu0
    %566 = vdwg.mxu0
    %v567 = vld [vmem:[%s2] sm:$0xff]
    %v568 = vld [vmem:[%s2 + $0x8] sm:$0xff]
    %v569 = vld [vmem:[%s2 + $0x10] sm:$0xff]
    %v570 = vld [vmem:[%s2 + $0x18] sm:$0xff]
    %571 = vrot.lane.b32.xlu0 %v149, 96
    %v572 = vpop.permute.xlu0 %571
    %573 = vrot.lane.b32.xlu0 %v151, 96
    %v574 = vpop.permute.xlu0 %573
    %v575 = vsel %vm239, %v572, 0
    %v577 = vsel %vm239, %v574, 0
    %579 = vmatprep.subr.mxu0 0.0
    %580 = vmatpush1.xpose.msra.mxu0 %v577
    %581 = vmatprep.subr.mxu0 0.0
    %582 = vmatpush1.xpose.msra.mxu0 0.0
    %583 = vmatprep.subr.mxu0 0.0
    %584 = vmatpush1.xpose.msra.mxu0 0.0
    %585 = vmatprep.subr.mxu0 0.0
    %586 = vmatpush1.xpose.msra.mxu0 0.0
    %587 = vmatprep.subr.mxu0 0.0
    %588 = vmatpush1.xpose.msra.mxu0 0.0
    %589 = vmatprep.subr.mxu0 0.0
    %590 = vmatpush1.xpose.msra.mxu0 0.0
    %591 = vmatprep.subr.mxu0 0.0
    %592 = vmatpush1.xpose.msra.mxu0 0.0
    %593 = vmatprep.subr.mxu0 0.0
    %594 = vmatpush1.xpose.msra.mxu0 0.0
    %595 = vmatprep.subr.mxu0 0.0
    %596 = vmatpush1.xpose.msra.mxu0 0.0
    %597 = vmatprep.subr.mxu0 0.0
    %598 = vmatpush1.xpose.msra.mxu0 0.0
    %599 = vmatprep.subr.mxu0 0.0
    %600 = vmatpush1.xpose.msra.mxu0 0.0
    %601 = vmatprep.subr.mxu0 0.0
    %602 = vmatpush1.xpose.msra.mxu0 0.0
    %603 = vmatprep.subr.mxu0 0.0
    %604 = vmatpush1.xpose.msra.mxu0 0.0
    %605 = vmatprep.subr.mxu0 0.0
    %606 = vmatpush1.xpose.msra.mxu0 0.0
    %607 = vmatprep.subr.mxu0 0.0
    %608 = vmatpush1.xpose.msra.mxu0 0.0
    %609 = vmatprep.subr.mxu0 0.0
    %610 = vmatpush1.xpose.msra.mxu0 0.0
    %611 = vmatprep.subr.mxu0 0.0
    %612 = vmatpush1.xpose.msra.mxu0 0.0
    %613 = vmatprep.subr.mxu0 0.0
    %614 = vmatpush1.xpose.msra.mxu0 0.0
    %615 = vmatprep.subr.mxu0 0.0
    %616 = vmatpush1.xpose.msra.mxu0 0.0
    %617 = vmatprep.subr.mxu0 0.0
    %618 = vmatpush1.xpose.msra.mxu0 0.0
    %619 = vmatprep.subr.mxu0 0.0
    %620 = vmatpush1.xpose.msra.mxu0 0.0
    %621 = vmatprep.subr.mxu0 0.0
    %622 = vmatpush1.xpose.msra.mxu0 0.0
    %623 = vmatprep.subr.mxu0 0.0
    %624 = vmatpush1.xpose.msra.mxu0 0.0
    %625 = vmatprep.subr.mxu0 0.0
    %626 = vmatpush1.xpose.msra.mxu0 0.0
    %627 = vmatprep.subr.mxu0 0.0
    %628 = vmatpush1.xpose.msra.mxu0 0.0
    %629 = vmatprep.subr.mxu0 0.0
    %630 = vmatpush1.xpose.msra.mxu0 0.0
    %631 = vmatprep.subr.mxu0 0.0
    %632 = vmatpush1.xpose.msra.mxu0 0.0
    %633 = vmatprep.subr.mxu0 0.0
    %634 = vmatpush1.xpose.msra.mxu0 0.0
    %635 = vmatprep.subr.mxu0 0.0
    %636 = vmatpush1.xpose.msra.mxu0 0.0
    %637 = vmatprep.subr.mxu0 0.0
    %638 = vmatpush1.xpose.msra.mxu0 0.0
    %639 = vmatprep.subr.mxu0 0.0
    %640 = vmatpush1.xpose.msra.mxu0 0.0
    %641 = vmatprep.subr.mxu0 0.0
    %642 = vmatpush1.xpose.msra.mxu0 0.0
    %643 = vmatprep.mubr.f32.mxu0 0.0
    %644 = vmatmul.mubr.f32.gmra.mrb[0].mxu0 %v575
    %v645 = vpop.f32.mrb[0].mxu0
    %v646 = vadd.f32 0.0, %v645
    %v647 = vpop.f32.mrb[0].mxu0
    %648 = vdwg.mxu0
    %649 = vrot.lane.b32.xlu0 %v155, 96
    %v650 = vpop.permute.xlu0 %649
    %651 = vrot.lane.b32.xlu0 %v157, 96
    %v652 = vpop.permute.xlu0 %651
    %v653 = vsel %vm239, %v650, 0
    %v655 = vsel %vm239, %v652, 0
    %657 = vmatprep.subr.mxu0 0.0
    %658 = vmatpush1.xpose.msra.mxu0 %v655
    %659 = vmatprep.subr.mxu0 0.0
    %660 = vmatpush1.xpose.msra.mxu0 0.0
    %661 = vmatprep.subr.mxu0 0.0
    %662 = vmatpush1.xpose.msra.mxu0 0.0
    %663 = vmatprep.subr.mxu0 0.0
    %664 = vmatpush1.xpose.msra.mxu0 0.0
    %665 = vmatprep.subr.mxu0 0.0
    %666 = vmatpush1.xpose.msra.mxu0 0.0
    %667 = vmatprep.subr.mxu0 0.0
    %668 = vmatpush1.xpose.msra.mxu0 0.0
    %669 = vmatprep.subr.mxu0 0.0
    %670 = vmatpush1.xpose.msra.mxu0 0.0
    %671 = vmatprep.subr.mxu0 0.0
    %672 = vmatpush1.xpose.msra.mxu0 0.0
    %673 = vmatprep.subr.mxu0 0.0
    %674 = vmatpush1.xpose.msra.mxu0 0.0
    %675 = vmatprep.subr.mxu0 0.0
    %676 = vmatpush1.xpose.msra.mxu0 0.0
    %677 = vmatprep.subr.mxu0 0.0
    %678 = vmatpush1.xpose.msra.mxu0 0.0
    %679 = vmatprep.subr.mxu0 0.0
    %680 = vmatpush1.xpose.msra.mxu0 0.0
    %681 = vmatprep.subr.mxu0 0.0
    %682 = vmatpush1.xpose.msra.mxu0 0.0
    %683 = vmatprep.subr.mxu0 0.0
    %684 = vmatpush1.xpose.msra.mxu0 0.0
    %685 = vmatprep.subr.mxu0 0.0
    %686 = vmatpush1.xpose.msra.mxu0 0.0
    %687 = vmatprep.subr.mxu0 0.0
    %688 = vmatpush1.xpose.msra.mxu0 0.0
    %689 = vmatprep.subr.mxu0 0.0
    %690 = vmatpush1.xpose.msra.mxu0 0.0
    %691 = vmatprep.subr.mxu0 0.0
    %692 = vmatpush1.xpose.msra.mxu0 0.0
    %693 = vmatprep.subr.mxu0 0.0
    %694 = vmatpush1.xpose.msra.mxu0 0.0
    %695 = vmatprep.subr.mxu0 0.0
    %696 = vmatpush1.xpose.msra.mxu0 0.0
    %697 = vmatprep.subr.mxu0 0.0
    %698 = vmatpush1.xpose.msra.mxu0 0.0
    %699 = vmatprep.subr.mxu0 0.0
    %700 = vmatpush1.xpose.msra.mxu0 0.0
    %701 = vmatprep.subr.mxu0 0.0
    %702 = vmatpush1.xpose.msra.mxu0 0.0
    %703 = vmatprep.subr.mxu0 0.0
    %704 = vmatpush1.xpose.msra.mxu0 0.0
    %705 = vmatprep.subr.mxu0 0.0
    %706 = vmatpush1.xpose.msra.mxu0 0.0
    %707 = vmatprep.subr.mxu0 0.0
    %708 = vmatpush1.xpose.msra.mxu0 0.0
    %709 = vmatprep.subr.mxu0 0.0
    %710 = vmatpush1.xpose.msra.mxu0 0.0
    %711 = vmatprep.subr.mxu0 0.0
    %712 = vmatpush1.xpose.msra.mxu0 0.0
    %713 = vmatprep.subr.mxu0 0.0
    %714 = vmatpush1.xpose.msra.mxu0 0.0
    %715 = vmatprep.subr.mxu0 0.0
    %716 = vmatpush1.xpose.msra.mxu0 0.0
    %717 = vmatprep.subr.mxu0 0.0
    %718 = vmatpush1.xpose.msra.mxu0 0.0
    %719 = vmatprep.subr.mxu0 0.0
    %720 = vmatpush1.xpose.msra.mxu0 0.0
    %721 = vmatprep.mubr.f32.mxu0 0.0
    %722 = vmatmul.mubr.f32.gmra.mrb[0].mxu0 %v653
    %v723 = vpop.f32.mrb[0].mxu0
    %v724 = vadd.f32 0.0, %v723
    %v725 = vpop.f32.mrb[0].mxu0
    %726 = vdwg.mxu0
    %v727 = vmul.f32 %v646, 0.1
    %v728 = vmul.f32 %v724, 0.1
    %v729 = vsel %vm395, %v727, -inf
    %v730 = vsel %vm395, %v728, -inf
    %v731 = vsel %vm398, %v729, -inf
    %732 = vmax.xlane.f32.xlu0 %v731
    %v733 = vpop.xlane.xlu0 %732
    %v734 = vsel %vm398, %v730, -inf
    %735 = vmax.xlane.f32.xlu0 %v734
    %v736 = vpop.xlane.xlu0 %735
    %v737 = vsub.f32 %v729, %v733
    %v738 = vsub.f32 %v730, %v736
    %v739 = vmul.f32 %v737, 1.442695
    %v740 = vpow.pop %v739
    %v741 = vmul.f32 %v738, 1.442695
    %v742 = vpow.pop %v741
    %v743 = vsel %vm398, %v740, 0.0
    %744 = vadd.xlane.f32.xlu0 %v743
    %v745 = vpop.xlane.xlu0 %744
    %v746 = vsel %vm398, %v742, 0.0
    %747 = vadd.xlane.f32.xlu0 %v746
    %v748 = vpop.xlane.xlu0 %747
    %v749 = vrcp.pop %v745
    %v750 = vrcp.pop %v748
    %v751 = vmul.f32 %v740, %v749
    %v752 = vmul.f32 %v742, %v750
    %754 = vrot.lane.b32.xlu0 %v226, 96
    %v755 = vpop.permute.xlu0 %754
    %v758 = vsel %vm398, %v751, 0
    %760 = vmatprep.subr.mxu0 0.0
    %761 = vmatpush1.msra.mxu0 %v755
    %762 = vmatprep.subr.mxu0 0.0
    %763 = vmatpush1.msra.mxu0 0.0
    %764 = vmatprep.subr.mxu0 0.0
    %765 = vmatpush1.msra.mxu0 0.0
    %766 = vmatprep.subr.mxu0 0.0
    %767 = vmatpush1.msra.mxu0 0.0
    %768 = vmatprep.subr.mxu0 0.0
    %769 = vmatpush1.msra.mxu0 0.0
    %770 = vmatprep.subr.mxu0 0.0
    %771 = vmatpush1.msra.mxu0 0.0
    %772 = vmatprep.subr.mxu0 0.0
    %773 = vmatpush1.msra.mxu0 0.0
    %774 = vmatprep.subr.mxu0 0.0
    %775 = vmatpush1.msra.mxu0 0.0
    %776 = vmatprep.subr.mxu0 0.0
    %777 = vmatpush1.msra.mxu0 0.0
    %778 = vmatprep.subr.mxu0 0.0
    %779 = vmatpush1.msra.mxu0 0.0
    %780 = vmatprep.subr.mxu0 0.0
    %781 = vmatpush1.msra.mxu0 0.0
    %782 = vmatprep.subr.mxu0 0.0
    %783 = vmatpush1.msra.mxu0 0.0
    %784 = vmatprep.subr.mxu0 0.0
    %785 = vmatpush1.msra.mxu0 0.0
    %786 = vmatprep.subr.mxu0 0.0
    %787 = vmatpush1.msra.mxu0 0.0
    %788 = vmatprep.subr.mxu0 0.0
    %789 = vmatpush1.msra.mxu0 0.0
    %790 = vmatprep.subr.mxu0 0.0
    %791 = vmatpush1.msra.mxu0 0.0
    %792 = vmatprep.subr.mxu0 0.0
    %793 = vmatpush1.msra.mxu0 0.0
    %794 = vmatprep.subr.mxu0 0.0
    %795 = vmatpush1.msra.mxu0 0.0
    %796 = vmatprep.subr.mxu0 0.0
    %797 = vmatpush1.msra.mxu0 0.0
    %798 = vmatprep.subr.mxu0 0.0
    %799 = vmatpush1.msra.mxu0 0.0
    %800 = vmatprep.subr.mxu0 0.0
    %801 = vmatpush1.msra.mxu0 0.0
    %802 = vmatprep.subr.mxu0 0.0
    %803 = vmatpush1.msra.mxu0 0.0
    %804 = vmatprep.subr.mxu0 0.0
    %805 = vmatpush1.msra.mxu0 0.0
    %806 = vmatprep.subr.mxu0 0.0
    %807 = vmatpush1.msra.mxu0 0.0
    %808 = vmatprep.subr.mxu0 0.0
    %809 = vmatpush1.msra.mxu0 0.0
    %810 = vmatprep.subr.mxu0 0.0
    %811 = vmatpush1.msra.mxu0 0.0
    %812 = vmatprep.subr.mxu0 0.0
    %813 = vmatpush1.msra.mxu0 0.0
    %814 = vmatprep.subr.mxu0 0.0
    %815 = vmatpush1.msra.mxu0 0.0
    %816 = vmatprep.subr.mxu0 0.0
    %817 = vmatpush1.msra.mxu0 0.0
    %818 = vmatprep.subr.mxu0 0.0
    %819 = vmatpush1.msra.mxu0 0.0
    %820 = vmatprep.subr.mxu0 0.0
    %821 = vmatpush1.msra.mxu0 0.0
    %822 = vmatprep.subr.mxu0 0.0
    %823 = vmatpush1.msra.mxu0 0.0
    %824 = vmatprep.mubr.f32.mxu0 0.0
    %825 = vmatmul.mubr.f32.gmra.mrb[0].mxu0 %v758
    %v826 = vpop.f32.mrb[0].mxu0
    %v827 = vadd.f32 0.0, %v826
    %v828 = vpop.f32.mrb[0].mxu0
    %829 = vdwg.mxu0
    %831 = vrot.lane.b32.xlu0 %v231, 96
    %v832 = vpop.permute.xlu0 %831
    %v835 = vsel %vm398, %v752, 0
    %837 = vmatprep.subr.mxu0 0.0
    %838 = vmatpush1.msra.mxu0 %v832
    %839 = vmatprep.subr.mxu0 0.0
    %840 = vmatpush1.msra.mxu0 0.0
    %841 = vmatprep.subr.mxu0 0.0
    %842 = vmatpush1.msra.mxu0 0.0
    %843 = vmatprep.subr.mxu0 0.0
    %844 = vmatpush1.msra.mxu0 0.0
    %845 = vmatprep.subr.mxu0 0.0
    %846 = vmatpush1.msra.mxu0 0.0
    %847 = vmatprep.subr.mxu0 0.0
    %848 = vmatpush1.msra.mxu0 0.0
    %849 = vmatprep.subr.mxu0 0.0
    %850 = vmatpush1.msra.mxu0 0.0
    %851 = vmatprep.subr.mxu0 0.0
    %852 = vmatpush1.msra.mxu0 0.0
    %853 = vmatprep.subr.mxu0 0.0
    %854 = vmatpush1.msra.mxu0 0.0
    %855 = vmatprep.subr.mxu0 0.0
    %856 = vmatpush1.msra.mxu0 0.0
    %857 = vmatprep.subr.mxu0 0.0
    %858 = vmatpush1.msra.mxu0 0.0
    %859 = vmatprep.subr.mxu0 0.0
    %860 = vmatpush1.msra.mxu0 0.0
    %861 = vmatprep.subr.mxu0 0.0
    %862 = vmatpush1.msra.mxu0 0.0
    %863 = vmatprep.subr.mxu0 0.0
    %864 = vmatpush1.msra.mxu0 0.0
    %865 = vmatprep.subr.mxu0 0.0
    %866 = vmatpush1.msra.mxu0 0.0
    %867 = vmatprep.subr.mxu0 0.0
    %868 = vmatpush1.msra.mxu0 0.0
    %869 = vmatprep.subr.mxu0 0.0
    %870 = vmatpush1.msra.mxu0 0.0
    %871 = vmatprep.subr.mxu0 0.0
    %872 = vmatpush1.msra.mxu0 0.0
    %873 = vmatprep.subr.mxu0 0.0
    %874 = vmatpush1.msra.mxu0 0.0
    %875 = vmatprep.subr.mxu0 0.0
    %876 = vmatpush1.msra.mxu0 0.0
    %877 = vmatprep.subr.mxu0 0.0
    %878 = vmatpush1.msra.mxu0 0.0
    %879 = vmatprep.subr.mxu0 0.0
    %880 = vmatpush1.msra.mxu0 0.0
    %881 = vmatprep.subr.mxu0 0.0
    %882 = vmatpush1.msra.mxu0 0.0
    %883 = vmatprep.subr.mxu0 0.0
    %884 = vmatpush1.msra.mxu0 0.0
    %885 = vmatprep.subr.mxu0 0.0
    %886 = vmatpush1.msra.mxu0 0.0
    %887 = vmatprep.subr.mxu0 0.0
    %888 = vmatpush1.msra.mxu0 0.0
    %889 = vmatprep.subr.mxu0 0.0
    %890 = vmatpush1.msra.mxu0 0.0
    %891 = vmatprep.subr.mxu0 0.0
    %892 = vmatpush1.msra.mxu0 0.0
    %893 = vmatprep.subr.mxu0 0.0
    %894 = vmatpush1.msra.mxu0 0.0
    %895 = vmatprep.subr.mxu0 0.0
    %896 = vmatpush1.msra.mxu0 0.0
    %897 = vmatprep.subr.mxu0 0.0
    %898 = vmatpush1.msra.mxu0 0.0
    %899 = vmatprep.subr.mxu0 0.0
    %900 = vmatpush1.msra.mxu0 0.0
    %901 = vmatprep.mubr.f32.mxu0 0.0
    %902 = vmatmul.mubr.f32.gmra.mrb[0].mxu0 %v835
    %v903 = vpop.f32.mrb[0].mxu0
    %v904 = vadd.f32 0.0, %v903
    %v905 = vpop.f32.mrb[0].mxu0
    %906 = vdwg.mxu0
    %v907 = vld [vmem:[%s2 + $0x20] sm:$0xff]
    %v908 = vld [vmem:[%s2 + $0x28] sm:$0xff]
    %v909 = vld [vmem:[%s2 + $0x30] sm:$0xff]
    %v910 = vld [vmem:[%s2 + $0x38] sm:$0xff]
    %v912 = vsel %vm239, %v827, 0
    %v915 = vsel %vm239, %v904, 0
    %917 = vmatprep.subr.mxu0 0.0
    %918 = vmatpush1.msra.mxu0 %v907
    %919 = vmatprep.subr.mxu0 0.0
    %920 = vmatpush1.msra.mxu0 %v908
    %921 = vmatprep.subr.mxu0 0.0
    %922 = vmatpush1.msra.mxu0 %v909
    %923 = vmatprep.subr.mxu0 0.0
    %924 = vmatpush1.msra.mxu0 %v910
    %925 = vmatprep.subr.mxu0 0.0
    %926 = vmatpush1.msra.mxu0 0.0
    %927 = vmatprep.subr.mxu0 0.0
    %928 = vmatpush1.msra.mxu0 0.0
    %929 = vmatprep.subr.mxu0 0.0
    %930 = vmatpush1.msra.mxu0 0.0
    %931 = vmatprep.subr.mxu0 0.0
    %932 = vmatpush1.msra.mxu0 0.0
    %933 = vmatprep.subr.mxu0 0.0
    %934 = vmatpush1.msra.mxu0 0.0
    %935 = vmatprep.subr.mxu0 0.0
    %936 = vmatpush1.msra.mxu0 0.0
    %937 = vmatprep.subr.mxu0 0.0
    %938 = vmatpush1.msra.mxu0 0.0
    %939 = vmatprep.subr.mxu0 0.0
    %940 = vmatpush1.msra.mxu0 0.0
    %941 = vmatprep.subr.mxu0 0.0
    %942 = vmatpush1.msra.mxu0 0.0
    %943 = vmatprep.subr.mxu0 0.0
    %944 = vmatpush1.msra.mxu0 0.0
    %945 = vmatprep.subr.mxu0 0.0
    %946 = vmatpush1.msra.mxu0 0.0
    %947 = vmatprep.subr.mxu0 0.0
    %948 = vmatpush1.msra.mxu0 0.0
    %949 = vmatprep.subr.mxu0 0.0
    %950 = vmatpush1.msra.mxu0 0.0
    %951 = vmatprep.subr.mxu0 0.0
    %952 = vmatpush1.msra.mxu0 0.0
    %953 = vmatprep.subr.mxu0 0.0
    %954 = vmatpush1.msra.mxu0 0.0
    %955 = vmatprep.subr.mxu0 0.0
    %956 = vmatpush1.msra.mxu0 0.0
    %957 = vmatprep.subr.mxu0 0.0
    %958 = vmatpush1.msra.mxu0 0.0
    %959 = vmatprep.subr.mxu0 0.0
    %960 = vmatpush1.msra.mxu0 0.0
    %961 = vmatprep.subr.mxu0 0.0
    %962 = vmatpush1.msra.mxu0 0.0
    %963 = vmatprep.subr.mxu0 0.0
    %964 = vmatpush1.msra.mxu0 0.0
    %965 = vmatprep.subr.mxu0 0.0
    %966 = vmatpush1.msra.mxu0 0.0
    %967 = vmatprep.subr.mxu0 0.0
    %968 = vmatpush1.msra.mxu0 0.0
    %969 = vmatprep.subr.mxu0 0.0
    %970 = vmatpush1.msra.mxu0 0.0
    %971 = vmatprep.subr.mxu0 0.0
    %972 = vmatpush1.msra.mxu0 0.0
    %973 = vmatprep.subr.mxu0 0.0
    %974 = vmatpush1.msra.mxu0 0.0
    %975 = vmatprep.subr.mxu0 0.0
    %976 = vmatpush1.msra.mxu0 0.0
    %977 = vmatprep.subr.mxu0 0.0
    %978 = vmatpush1.msra.mxu0 0.0
    %979 = vmatprep.subr.mxu0 0.0
    %980 = vmatpush1.msra.mxu0 0.0
    %981 = vmatprep.mubr.f32.mxu0 0.0
    %982 = vmatmul.mubr.f32.gmra.mrb[0].mxu0 %v912
    %v983 = vpop.f32.mrb[0].mxu0
    %v984 = vadd.f32 0.0, %v983
    %v985 = vpop.f32.mrb[0].mxu0
    %986 = vmatprep.mubr.f32.mxu0 0.0
    %987 = vmatmul.mubr.f32.gmra.mrb[0].mxu0 %v915
    %v988 = vpop.f32.mrb[0].mxu0
    %v989 = vadd.f32 0.0, %v988
    %v990 = vpop.f32.mrb[0].mxu0
    %991 = vdwg.mxu0
    %v993 = vsel %vm239, %v491, 0
    %v996 = vsel %vm239, %v564, 0
    %998 = vmatprep.subr.mxu0 0.0
    %999 = vmatpush1.msra.mxu0 %v567
    %1000 = vmatprep.subr.mxu0 0.0
    %1001 = vmatpush1.msra.mxu0 %v568
    %1002 = vmatprep.subr.mxu0 0.0
    %1003 = vmatpush1.msra.mxu0 %v569
    %1004 = vmatprep.subr.mxu0 0.0
    %1005 = vmatpush1.msra.mxu0 %v570
    %1006 = vmatprep.subr.mxu0 0.0
    %1007 = vmatpush1.msra.mxu0 0.0
    %1008 = vmatprep.subr.mxu0 0.0
    %1009 = vmatpush1.msra.mxu0 0.0
    %1010 = vmatprep.subr.mxu0 0.0
    %1011 = vmatpush1.msra.mxu0 0.0
    %1012 = vmatprep.subr.mxu0 0.0
    %1013 = vmatpush1.msra.mxu0 0.0
    %1014 = vmatprep.subr.mxu0 0.0
    %1015 = vmatpush1.msra.mxu0 0.0
    %1016 = vmatprep.subr.mxu0 0.0
    %1017 = vmatpush1.msra.mxu0 0.0
    %1018 = vmatprep.subr.mxu0 0.0
    %1019 = vmatpush1.msra.mxu0 0.0
    %1020 = vmatprep.subr.mxu0 0.0
    %1021 = vmatpush1.msra.mxu0 0.0
    %1022 = vmatprep.subr.mxu0 0.0
    %1023 = vmatpush1.msra.mxu0 0.0
    %1024 = vmatprep.subr.mxu0 0.0
    %1025 = vmatpush1.msra.mxu0 0.0
    %1026 = vmatprep.subr.mxu0 0.0
    %1027 = vmatpush1.msra.mxu0 0.0
    %1028 = vmatprep.subr.mxu0 0.0
    %1029 = vmatpush1.msra.mxu0 0.0
    %1030 = vmatprep.subr.mxu0 0.0
    %1031 = vmatpush1.msra.mxu0 0.0
    %1032 = vmatprep.subr.mxu0 0.0
    %1033 = vmatpush1.msra.mxu0 0.0
    %1034 = vmatprep.subr.mxu0 0.0
    %1035 = vmatpush1.msra.mxu0 0.0
    %1036 = vmatprep.subr.mxu0 0.0
    %1037 = vmatpush1.msra.mxu0 0.0
    %1038 = vmatprep.subr.mxu0 0.0
    %1039 = vmatpush1.msra.mxu0 0.0
    %1040 = vmatprep.subr.mxu0 0.0
    %1041 = vmatpush1.msra.mxu0 0.0
    %1042 = vmatprep.subr.mxu0 0.0
    %1043 = vmatpush1.msra.mxu0 0.0
    %1044 = vmatprep.subr.mxu0 0.0
    %1045 = vmatpush1.msra.mxu0 0.0
    %1046 = vmatprep.subr.mxu0 0.0
    %1047 = vmatpush1.msra.mxu0 0.0
    %1048 = vmatprep.subr.mxu0 0.0
    %1049 = vmatpush1.msra.mxu0 0.0
    %1050 = vmatprep.subr.mxu0 0.0
    %1051 = vmatpush1.msra.mxu0 0.0
    %1052 = vmatprep.subr.mxu0 0.0
    %1053 = vmatpush1.msra.mxu0 0.0
    %1054 = vmatprep.subr.mxu0 0.0
    %1055 = vmatpush1.msra.mxu0 0.0
    %1056 = vmatprep.subr.mxu0 0.0
    %1057 = vmatpush1.msra.mxu0 0.0
    %1058 = vmatprep.subr.mxu0 0.0
    %1059 = vmatpush1.msra.mxu0 0.0
    %1060 = vmatprep.subr.mxu0 0.0
    %1061 = vmatpush1.msra.mxu0 0.0
    %1062 = vmatprep.mubr.f32.mxu0 0.0
    %1063 = vmatmul.mubr.f32.gmra.mrb[0].mxu0 %v993
    %v1064 = vpop.f32.mrb[0].mxu0
    %v1065 = vadd.f32 %v984, %v1064
    %v1066 = vpop.f32.mrb[0].mxu0
    %1067 = vmatprep.mubr.f32.mxu0 0.0
    %1068 = vmatmul.mubr.f32.gmra.mrb[0].mxu0 %v996
    %v1069 = vpop.f32.mrb[0].mxu0
    %v1070 = vadd.f32 %v989, %v1069
    %v1071 = vpop.f32.mrb[0].mxu0
    %1072 = vdwg.mxu0
    %1073 = vrot.lane.b32.xlu0 %v149, 64
    %v1074 = vpop.permute.xlu0 %1073
    %1075 = vrot.lane.b32.xlu0 %v151, 64
    %v1076 = vpop.permute.xlu0 %1075
    %v1077 = vsel %vm239, %v1074, 0
    %v1079 = vsel %vm239, %v1076, 0
    %1081 = vmatprep.subr.mxu0 0.0
    %1082 = vmatpush1.xpose.msra.mxu0 %v1079
    %1083 = vmatprep.subr.mxu0 0.0
    %1084 = vmatpush1.xpose.msra.mxu0 0.0
    %1085 = vmatprep.subr.mxu0 0.0
    %1086 = vmatpush1.xpose.msra.mxu0 0.0
    %1087 = vmatprep.subr.mxu0 0.0
    %1088 = vmatpush1.xpose.msra.mxu0 0.0
    %1089 = vmatprep.subr.mxu0 0.0
    %1090 = vmatpush1.xpose.msra.mxu0 0.0
    %1091 = vmatprep.subr.mxu0 0.0
    %1092 = vmatpush1.xpose.msra.mxu0 0.0
    %1093 = vmatprep.subr.mxu0 0.0
    %1094 = vmatpush1.xpose.msra.mxu0 0.0
    %1095 = vmatprep.subr.mxu0 0.0
    %1096 = vmatpush1.xpose.msra.mxu0 0.0
    %1097 = vmatprep.subr.mxu0 0.0
    %1098 = vmatpush1.xpose.msra.mxu0 0.0
    %1099 = vmatprep.subr.mxu0 0.0
    %1100 = vmatpush1.xpose.msra.mxu0 0.0
    %1101 = vmatprep.subr.mxu0 0.0
    %1102 = vmatpush1.xpose.msra.mxu0 0.0
    %1103 = vmatprep.subr.mxu0 0.0
    %1104 = vmatpush1.xpose.msra.mxu0 0.0
    %1105 = vmatprep.subr.mxu0 0.0
    %1106 = vmatpush1.xpose.msra.mxu0 0.0
    %1107 = vmatprep.subr.mxu0 0.0
    %1108 = vmatpush1.xpose.msra.mxu0 0.0
    %1109 = vmatprep.subr.mxu0 0.0
    %1110 = vmatpush1.xpose.msra.mxu0 0.0
    %1111 = vmatprep.subr.mxu0 0.0
    %1112 = vmatpush1.xpose.msra.mxu0 0.0
    %1113 = vmatprep.subr.mxu0 0.0
    %1114 = vmatpush1.xpose.msra.mxu0 0.0
    %1115 = vmatprep.subr.mxu0 0.0
    %1116 = vmatpush1.xpose.msra.mxu0 0.0
    %1117 = vmatprep.subr.mxu0 0.0
    %1118 = vmatpush1.xpose.msra.mxu0 0.0
    %1119 = vmatprep.subr.mxu0 0.0
    %1120 = vmatpush1.xpose.msra.mxu0 0.0
    %1121 = vmatprep.subr.mxu0 0.0
    %1122 = vmatpush1.xpose.msra.mxu0 0.0
    %1123 = vmatprep.subr.mxu0 0.0
    %1124 = vmatpush1.xpose.msra.mxu0 0.0
    %1125 = vmatprep.subr.mxu0 0.0
    %1126 = vmatpush1.xpose.msra.mxu0 0.0
    %1127 = vmatprep.subr.mxu0 0.0
    %1128 = vmatpush1.xpose.msra.mxu0 0.0
    %1129 = vmatprep.subr.mxu0 0.0
    %1130 = vmatpush1.xpose.msra.mxu0 0.0
    %1131 = vmatprep.subr.mxu0 0.0
    %1132 = vmatpush1.xpose.msra.mxu0 0.0
    %1133 = vmatprep.subr.mxu0 0.0
    %1134 = vmatpush1.xpose.msra.mxu0 0.0
    %1135 = vmatprep.subr.mxu0 0.0
    %1136 = vmatpush1.xpose.msra.mxu0 0.0
    %1137 = vmatprep.subr.mxu0 0.0
    %1138 = vmatpush1.xpose.msra.mxu0 0.0
    %1139 = vmatprep.subr.mxu0 0.0
    %1140 = vmatpush1.xpose.msra.mxu0 0.0
    %1141 = vmatprep.subr.mxu0 0.0
    %1142 = vmatpush1.xpose.msra.mxu0 0.0
    %1143 = vmatprep.subr.mxu0 0.0
    %1144 = vmatpush1.xpose.msra.mxu0 0.0
    %1145 = vmatprep.mubr.f32.mxu0 0.0
    %1146 = vmatmul.mubr.f32.gmra.mrb[0].mxu0 %v1077
    %v1147 = vpop.f32.mrb[0].mxu0
    %v1148 = vadd.f32 0.0, %v1147
    %v1149 = vpop.f32.mrb[0].mxu0
    %1150 = vdwg.mxu0
    %1151 = vrot.lane.b32.xlu0 %v155, 64
    %v1152 = vpop.permute.xlu0 %1151
    %1153 = vrot.lane.b32.xlu0 %v157, 64
    %v1154 = vpop.permute.xlu0 %1153
    %v1155 = vsel %vm239, %v1152, 0
    %v1157 = vsel %vm239, %v1154, 0
    %1159 = vmatprep.subr.mxu0 0.0
    %1160 = vmatpush1.xpose.msra.mxu0 %v1157
    %1161 = vmatprep.subr.mxu0 0.0
    %1162 = vmatpush1.xpose.msra.mxu0 0.0
    %1163 = vmatprep.subr.mxu0 0.0
    %1164 = vmatpush1.xpose.msra.mxu0 0.0
    %1165 = vmatprep.subr.mxu0 0.0
    %1166 = vmatpush1.xpose.msra.mxu0 0.0
    %1167 = vmatprep.subr.mxu0 0.0
    %1168 = vmatpush1.xpose.msra.mxu0 0.0
    %1169 = vmatprep.subr.mxu0 0.0
    %1170 = vmatpush1.xpose.msra.mxu0 0.0
    %1171 = vmatprep.subr.mxu0 0.0
    %1172 = vmatpush1.xpose.msra.mxu0 0.0
    %1173 = vmatprep.subr.mxu0 0.0
    %1174 = vmatpush1.xpose.msra.mxu0 0.0
    %1175 = vmatprep.subr.mxu0 0.0
    %1176 = vmatpush1.xpose.msra.mxu0 0.0
    %1177 = vmatprep.subr.mxu0 0.0
    %1178 = vmatpush1.xpose.msra.mxu0 0.0
    %1179 = vmatprep.subr.mxu0 0.0
    %1180 = vmatpush1.xpose.msra.mxu0 0.0
    %1181 = vmatprep.subr.mxu0 0.0
    %1182 = vmatpush1.xpose.msra.mxu0 0.0
    %1183 = vmatprep.subr.mxu0 0.0
    %1184 = vmatpush1.xpose.msra.mxu0 0.0
    %1185 = vmatprep.subr.mxu0 0.0
    %1186 = vmatpush1.xpose.msra.mxu0 0.0
    %1187 = vmatprep.subr.mxu0 0.0
    %1188 = vmatpush1.xpose.msra.mxu0 0.0
    %1189 = vmatprep.subr.mxu0 0.0
    %1190 = vmatpush1.xpose.msra.mxu0 0.0
    %1191 = vmatprep.subr.mxu0 0.0
    %1192 = vmatpush1.xpose.msra.mxu0 0.0
    %1193 = vmatprep.subr.mxu0 0.0
    %1194 = vmatpush1.xpose.msra.mxu0 0.0
    %1195 = vmatprep.subr.mxu0 0.0
    %1196 = vmatpush1.xpose.msra.mxu0 0.0
    %1197 = vmatprep.subr.mxu0 0.0
    %1198 = vmatpush1.xpose.msra.mxu0 0.0
    %1199 = vmatprep.subr.mxu0 0.0
    %1200 = vmatpush1.xpose.msra.mxu0 0.0
    %1201 = vmatprep.subr.mxu0 0.0
    %1202 = vmatpush1.xpose.msra.mxu0 0.0
    %1203 = vmatprep.subr.mxu0 0.0
    %1204 = vmatpush1.xpose.msra.mxu0 0.0
    %1205 = vmatprep.subr.mxu0 0.0
    %1206 = vmatpush1.xpose.msra.mxu0 0.0
    %1207 = vmatprep.subr.mxu0 0.0
    %1208 = vmatpush1.xpose.msra.mxu0 0.0
    %1209 = vmatprep.subr.mxu0 0.0
    %1210 = vmatpush1.xpose.msra.mxu0 0.0
    %1211 = vmatprep.subr.mxu0 0.0
    %1212 = vmatpush1.xpose.msra.mxu0 0.0
    %1213 = vmatprep.subr.mxu0 0.0
    %1214 = vmatpush1.xpose.msra.mxu0 0.0
    %1215 = vmatprep.subr.mxu0 0.0
    %1216 = vmatpush1.xpose.msra.mxu0 0.0
    %1217 = vmatprep.subr.mxu0 0.0
    %1218 = vmatpush1.xpose.msra.mxu0 0.0
    %1219 = vmatprep.subr.mxu0 0.0
    %1220 = vmatpush1.xpose.msra.mxu0 0.0
    %1221 = vmatprep.subr.mxu0 0.0
    %1222 = vmatpush1.xpose.msra.mxu0 0.0
    %1223 = vmatprep.mubr.f32.mxu0 0.0
    %1224 = vmatmul.mubr.f32.gmra.mrb[0].mxu0 %v1155
    %v1225 = vpop.f32.mrb[0].mxu0
    %v1226 = vadd.f32 0.0, %v1225
    %v1227 = vpop.f32.mrb[0].mxu0
    %1228 = vdwg.mxu0
    %v1229 = vmul.f32 %v1148, 0.1
    %v1230 = vmul.f32 %v1226, 0.1
    %v1231 = vsel %vm395, %v1229, -inf
    %v1232 = vsel %vm395, %v1230, -inf
    %v1233 = vsel %vm398, %v1231, -inf
    %1234 = vmax.xlane.f32.xlu0 %v1233
    %v1235 = vpop.xlane.xlu0 %1234
    %v1236 = vsel %vm398, %v1232, -inf
    %1237 = vmax.xlane.f32.xlu0 %v1236
    %v1238 = vpop.xlane.xlu0 %1237
    %v1239 = vsub.f32 %v1231, %v1235
    %v1240 = vsub.f32 %v1232, %v1238
    %v1241 = vmul.f32 %v1239, 1.442695
    %v1242 = vpow.pop %v1241
    %v1243 = vmul.f32 %v1240, 1.442695
    %v1244 = vpow.pop %v1243
    %v1245 = vsel %vm398, %v1242, 0.0
    %1246 = vadd.xlane.f32.xlu0 %v1245
    %v1247 = vpop.xlane.xlu0 %1246
    %v1248 = vsel %vm398, %v1244, 0.0
    %1249 = vadd.xlane.f32.xlu0 %v1248
    %v1250 = vpop.xlane.xlu0 %1249
    %v1251 = vrcp.pop %v1247
    %v1252 = vrcp.pop %v1250
    %v1253 = vmul.f32 %v1242, %v1251
    %v1254 = vmul.f32 %v1244, %v1252
    %1255 = vrot.lane.b32.xlu0 %v226, 64
    %v1256 = vpop.permute.xlu0 %1255
    %v1259 = vsel %vm398, %v1253, 0
    %1261 = vmatprep.subr.mxu0 0.0
    %1262 = vmatpush1.msra.mxu0 %v1256
    %1263 = vmatprep.subr.mxu0 0.0
    %1264 = vmatpush1.msra.mxu0 0.0
    %1265 = vmatprep.subr.mxu0 0.0
    %1266 = vmatpush1.msra.mxu0 0.0
    %1267 = vmatprep.subr.mxu0 0.0
    %1268 = vmatpush1.msra.mxu0 0.0
    %1269 = vmatprep.subr.mxu0 0.0
    %1270 = vmatpush1.msra.mxu0 0.0
    %1271 = vmatprep.subr.mxu0 0.0
    %1272 = vmatpush1.msra.mxu0 0.0
    %1273 = vmatprep.subr.mxu0 0.0
    %1274 = vmatpush1.msra.mxu0 0.0
    %1275 = vmatprep.subr.mxu0 0.0
    %1276 = vmatpush1.msra.mxu0 0.0
    %1277 = vmatprep.subr.mxu0 0.0
    %1278 = vmatpush1.msra.mxu0 0.0
    %1279 = vmatprep.subr.mxu0 0.0
    %1280 = vmatpush1.msra.mxu0 0.0
    %1281 = vmatprep.subr.mxu0 0.0
    %1282 = vmatpush1.msra.mxu0 0.0
    %1283 = vmatprep.subr.mxu0 0.0
    %1284 = vmatpush1.msra.mxu0 0.0
    %1285 = vmatprep.subr.mxu0 0.0
    %1286 = vmatpush1.msra.mxu0 0.0
    %1287 = vmatprep.subr.mxu0 0.0
    %1288 = vmatpush1.msra.mxu0 0.0
    %1289 = vmatprep.subr.mxu0 0.0
    %1290 = vmatpush1.msra.mxu0 0.0
    %1291 = vmatprep.subr.mxu0 0.0
    %1292 = vmatpush1.msra.mxu0 0.0
    %1293 = vmatprep.subr.mxu0 0.0
    %1294 = vmatpush1.msra.mxu0 0.0
    %1295 = vmatprep.subr.mxu0 0.0
    %1296 = vmatpush1.msra.mxu0 0.0
    %1297 = vmatprep.subr.mxu0 0.0
    %1298 = vmatpush1.msra.mxu0 0.0
    %1299 = vmatprep.subr.mxu0 0.0
    %1300 = vmatpush1.msra.mxu0 0.0
    %1301 = vmatprep.subr.mxu0 0.0
    %1302 = vmatpush1.msra.mxu0 0.0
    %1303 = vmatprep.subr.mxu0 0.0
    %1304 = vmatpush1.msra.mxu0 0.0
    %1305 = vmatprep.subr.mxu0 0.0
    %1306 = vmatpush1.msra.mxu0 0.0
    %1307 = vmatprep.subr.mxu0 0.0
    %1308 = vmatpush1.msra.mxu0 0.0
    %1309 = vmatprep.subr.mxu0 0.0
    %1310 = vmatpush1.msra.mxu0 0.0
    %1311 = vmatprep.subr.mxu0 0.0
    %1312 = vmatpush1.msra.mxu0 0.0
    %1313 = vmatprep.subr.mxu0 0.0
    %1314 = vmatpush1.msra.mxu0 0.0
    %1315 = vmatprep.subr.mxu0 0.0
    %1316 = vmatpush1.msra.mxu0 0.0
    %1317 = vmatprep.subr.mxu0 0.0
    %1318 = vmatpush1.msra.mxu0 0.0
    %1319 = vmatprep.subr.mxu0 0.0
    %1320 = vmatpush1.msra.mxu0 0.0
    %1321 = vmatprep.subr.mxu0 0.0
    %1322 = vmatpush1.msra.mxu0 0.0
    %1323 = vmatprep.subr.mxu0 0.0
    %1324 = vmatpush1.msra.mxu0 0.0
    %1325 = vmatprep.mubr.f32.mxu0 0.0
    %1326 = vmatmul.mubr.f32.gmra.mrb[0].mxu0 %v1259
    %v1327 = vpop.f32.mrb[0].mxu0
    %v1328 = vadd.f32 0.0, %v1327
    %v1329 = vpop.f32.mrb[0].mxu0
    %1330 = vdwg.mxu0
    %1331 = vrot.lane.b32.xlu0 %v231, 64
    %v1332 = vpop.permute.xlu0 %1331
    %v1335 = vsel %vm398, %v1254, 0
    %1337 = vmatprep.subr.mxu0 0.0
    %1338 = vmatpush1.msra.mxu0 %v1332
    %1339 = vmatprep.subr.mxu0 0.0
    %1340 = vmatpush1.msra.mxu0 0.0
    %1341 = vmatprep.subr.mxu0 0.0
    %1342 = vmatpush1.msra.mxu0 0.0
    %1343 = vmatprep.subr.mxu0 0.0
    %1344 = vmatpush1.msra.mxu0 0.0
    %1345 = vmatprep.subr.mxu0 0.0
    %1346 = vmatpush1.msra.mxu0 0.0
    %1347 = vmatprep.subr.mxu0 0.0
    %1348 = vmatpush1.msra.mxu0 0.0
    %1349 = vmatprep.subr.mxu0 0.0
    %1350 = vmatpush1.msra.mxu0 0.0
    %1351 = vmatprep.subr.mxu0 0.0
    %1352 = vmatpush1.msra.mxu0 0.0
    %1353 = vmatprep.subr.mxu0 0.0
    %1354 = vmatpush1.msra.mxu0 0.0
    %1355 = vmatprep.subr.mxu0 0.0
    %1356 = vmatpush1.msra.mxu0 0.0
    %1357 = vmatprep.subr.mxu0 0.0
    %1358 = vmatpush1.msra.mxu0 0.0
    %1359 = vmatprep.subr.mxu0 0.0
    %1360 = vmatpush1.msra.mxu0 0.0
    %1361 = vmatprep.subr.mxu0 0.0
    %1362 = vmatpush1.msra.mxu0 0.0
    %1363 = vmatprep.subr.mxu0 0.0
    %1364 = vmatpush1.msra.mxu0 0.0
    %1365 = vmatprep.subr.mxu0 0.0
    %1366 = vmatpush1.msra.mxu0 0.0
    %1367 = vmatprep.subr.mxu0 0.0
    %1368 = vmatpush1.msra.mxu0 0.0
    %1369 = vmatprep.subr.mxu0 0.0
    %1370 = vmatpush1.msra.mxu0 0.0
    %1371 = vmatprep.subr.mxu0 0.0
    %1372 = vmatpush1.msra.mxu0 0.0
    %1373 = vmatprep.subr.mxu0 0.0
    %1374 = vmatpush1.msra.mxu0 0.0
    %1375 = vmatprep.subr.mxu0 0.0
    %1376 = vmatpush1.msra.mxu0 0.0
    %1377 = vmatprep.subr.mxu0 0.0
    %1378 = vmatpush1.msra.mxu0 0.0
    %1379 = vmatprep.subr.mxu0 0.0
    %1380 = vmatpush1.msra.mxu0 0.0
    %1381 = vmatprep.subr.mxu0 0.0
    %1382 = vmatpush1.msra.mxu0 0.0
    %1383 = vmatprep.subr.mxu0 0.0
    %1384 = vmatpush1.msra.mxu0 0.0
    %1385 = vmatprep.subr.mxu0 0.0
    %1386 = vmatpush1.msra.mxu0 0.0
    %1387 = vmatprep.subr.mxu0 0.0
    %1388 = vmatpush1.msra.mxu0 0.0
    %1389 = vmatprep.subr.mxu0 0.0
    %1390 = vmatpush1.msra.mxu0 0.0
    %1391 = vmatprep.subr.mxu0 0.0
    %1392 = vmatpush1.msra.mxu0 0.0
    %1393 = vmatprep.subr.mxu0 0.0
    %1394 = vmatpush1.msra.mxu0 0.0
    %1395 = vmatprep.subr.mxu0 0.0
    %1396 = vmatpush1.msra.mxu0 0.0
    %1397 = vmatprep.subr.mxu0 0.0
    %1398 = vmatpush1.msra.mxu0 0.0
    %1399 = vmatprep.subr.mxu0 0.0
    %1400 = vmatpush1.msra.mxu0 0.0
    %1401 = vmatprep.mubr.f32.mxu0 0.0
    %1402 = vmatmul.mubr.f32.gmra.mrb[0].mxu0 %v1335
    %v1403 = vpop.f32.mrb[0].mxu0
    %v1404 = vadd.f32 0.0, %v1403
    %v1405 = vpop.f32.mrb[0].mxu0
    %1406 = vdwg.mxu0
    %v1407 = vld [vmem:[%s2 + $0x40] sm:$0xff]
    %v1408 = vld [vmem:[%s2 + $0x48] sm:$0xff]
    %v1409 = vld [vmem:[%s2 + $0x50] sm:$0xff]
    %v1410 = vld [vmem:[%s2 + $0x58] sm:$0xff]
    %v1412 = vsel %vm239, %v1328, 0
    %v1415 = vsel %vm239, %v1404, 0
    %1417 = vmatprep.subr.mxu0 0.0
    %1418 = vmatpush1.msra.mxu0 %v1407
    %1419 = vmatprep.subr.mxu0 0.0
    %1420 = vmatpush1.msra.mxu0 %v1408
    %1421 = vmatprep.subr.mxu0 0.0
    %1422 = vmatpush1.msra.mxu0 %v1409
    %1423 = vmatprep.subr.mxu0 0.0
    %1424 = vmatpush1.msra.mxu0 %v1410
    %1425 = vmatprep.subr.mxu0 0.0
    %1426 = vmatpush1.msra.mxu0 0.0
    %1427 = vmatprep.subr.mxu0 0.0
    %1428 = vmatpush1.msra.mxu0 0.0
    %1429 = vmatprep.subr.mxu0 0.0
    %1430 = vmatpush1.msra.mxu0 0.0
    %1431 = vmatprep.subr.mxu0 0.0
    %1432 = vmatpush1.msra.mxu0 0.0
    %1433 = vmatprep.subr.mxu0 0.0
    %1434 = vmatpush1.msra.mxu0 0.0
    %1435 = vmatprep.subr.mxu0 0.0
    %1436 = vmatpush1.msra.mxu0 0.0
    %1437 = vmatprep.subr.mxu0 0.0
    %1438 = vmatpush1.msra.mxu0 0.0
    %1439 = vmatprep.subr.mxu0 0.0
    %1440 = vmatpush1.msra.mxu0 0.0
    %1441 = vmatprep.subr.mxu0 0.0
    %1442 = vmatpush1.msra.mxu0 0.0
    %1443 = vmatprep.subr.mxu0 0.0
    %1444 = vmatpush1.msra.mxu0 0.0
    %1445 = vmatprep.subr.mxu0 0.0
    %1446 = vmatpush1.msra.mxu0 0.0
    %1447 = vmatprep.subr.mxu0 0.0
    %1448 = vmatpush1.msra.mxu0 0.0
    %1449 = vmatprep.subr.mxu0 0.0
    %1450 = vmatpush1.msra.mxu0 0.0
    %1451 = vmatprep.subr.mxu0 0.0
    %1452 = vmatpush1.msra.mxu0 0.0
    %1453 = vmatprep.subr.mxu0 0.0
    %1454 = vmatpush1.msra.mxu0 0.0
    %1455 = vmatprep.subr.mxu0 0.0
    %1456 = vmatpush1.msra.mxu0 0.0
    %1457 = vmatprep.subr.mxu0 0.0
    %1458 = vmatpush1.msra.mxu0 0.0
    %1459 = vmatprep.subr.mxu0 0.0
    %1460 = vmatpush1.msra.mxu0 0.0
    %1461 = vmatprep.subr.mxu0 0.0
    %1462 = vmatpush1.msra.mxu0 0.0
    %1463 = vmatprep.subr.mxu0 0.0
    %1464 = vmatpush1.msra.mxu0 0.0
    %1465 = vmatprep.subr.mxu0 0.0
    %1466 = vmatpush1.msra.mxu0 0.0
    %1467 = vmatprep.subr.mxu0 0.0
    %1468 = vmatpush1.msra.mxu0 0.0
    %1469 = vmatprep.subr.mxu0 0.0
    %1470 = vmatpush1.msra.mxu0 0.0
    %1471 = vmatprep.subr.mxu0 0.0
    %1472 = vmatpush1.msra.mxu0 0.0
    %1473 = vmatprep.subr.mxu0 0.0
    %1474 = vmatpush1.msra.mxu0 0.0
    %1475 = vmatprep.subr.mxu0 0.0
    %1476 = vmatpush1.msra.mxu0 0.0
    %1477 = vmatprep.subr.mxu0 0.0
    %1478 = vmatpush1.msra.mxu0 0.0
    %1479 = vmatprep.subr.mxu0 0.0
    %1480 = vmatpush1.msra.mxu0 0.0
    %1481 = vmatprep.mubr.f32.mxu0 0.0
    %1482 = vmatmul.mubr.f32.gmra.mrb[0].mxu0 %v1412
    %v1483 = vpop.f32.mrb[0].mxu0
    %v1484 = vadd.f32 0.0, %v1483
    %v1485 = vpop.f32.mrb[0].mxu0
    %1486 = vmatprep.mubr.f32.mxu0 0.0
    %1487 = vmatmul.mubr.f32.gmra.mrb[0].mxu0 %v1415
    %v1488 = vpop.f32.mrb[0].mxu0
    %v1489 = vadd.f32 0.0, %v1488
    %v1490 = vpop.f32.mrb[0].mxu0
    %1491 = vdwg.mxu0
    %v1492 = vadd.f32 %v1065, %v1484
    %v1493 = vadd.f32 %v1070, %v1489
    %1494 = vrot.lane.b32.xlu0 %v149, 32
    %v1495 = vpop.permute.xlu0 %1494
    %1496 = vrot.lane.b32.xlu0 %v151, 32
    %v1497 = vpop.permute.xlu0 %1496
    %v1498 = vsel %vm239, %v1495, 0
    %v1500 = vsel %vm239, %v1497, 0
    %1502 = vmatprep.subr.mxu0 0.0
    %1503 = vmatpush1.xpose.msra.mxu0 %v1500
    %1504 = vmatprep.subr.mxu0 0.0
    %1505 = vmatpush1.xpose.msra.mxu0 0.0
    %1506 = vmatprep.subr.mxu0 0.0
    %1507 = vmatpush1.xpose.msra.mxu0 0.0
    %1508 = vmatprep.subr.mxu0 0.0
    %1509 = vmatpush1.xpose.msra.mxu0 0.0
    %1510 = vmatprep.subr.mxu0 0.0
    %1511 = vmatpush1.xpose.msra.mxu0 0.0
    %1512 = vmatprep.subr.mxu0 0.0
    %1513 = vmatpush1.xpose.msra.mxu0 0.0
    %1514 = vmatprep.subr.mxu0 0.0
    %1515 = vmatpush1.xpose.msra.mxu0 0.0
    %1516 = vmatprep.subr.mxu0 0.0
    %1517 = vmatpush1.xpose.msra.mxu0 0.0
    %1518 = vmatprep.subr.mxu0 0.0
    %1519 = vmatpush1.xpose.msra.mxu0 0.0
    %1520 = vmatprep.subr.mxu0 0.0
    %1521 = vmatpush1.xpose.msra.mxu0 0.0
    %1522 = vmatprep.subr.mxu0 0.0
    %1523 = vmatpush1.xpose.msra.mxu0 0.0
    %1524 = vmatprep.subr.mxu0 0.0
    %1525 = vmatpush1.xpose.msra.mxu0 0.0
    %1526 = vmatprep.subr.mxu0 0.0
    %1527 = vmatpush1.xpose.msra.mxu0 0.0
    %1528 = vmatprep.subr.mxu0 0.0
    %1529 = vmatpush1.xpose.msra.mxu0 0.0
    %1530 = vmatprep.subr.mxu0 0.0
    %1531 = vmatpush1.xpose.msra.mxu0 0.0
    %1532 = vmatprep.subr.mxu0 0.0
    %1533 = vmatpush1.xpose.msra.mxu0 0.0
    %1534 = vmatprep.subr.mxu0 0.0
    %1535 = vmatpush1.xpose.msra.mxu0 0.0
    %1536 = vmatprep.subr.mxu0 0.0
    %1537 = vmatpush1.xpose.msra.mxu0 0.0
    %1538 = vmatprep.subr.mxu0 0.0
    %1539 = vmatpush1.xpose.msra.mxu0 0.0
    %1540 = vmatprep.subr.mxu0 0.0
    %1541 = vmatpush1.xpose.msra.mxu0 0.0
    %1542 = vmatprep.subr.mxu0 0.0
    %1543 = vmatpush1.xpose.msra.mxu0 0.0
    %1544 = vmatprep.subr.mxu0 0.0
    %1545 = vmatpush1.xpose.msra.mxu0 0.0
    %1546 = vmatprep.subr.mxu0 0.0
    %1547 = vmatpush1.xpose.msra.mxu0 0.0
    %1548 = vmatprep.subr.mxu0 0.0
    %1549 = vmatpush1.xpose.msra.mxu0 0.0
    %1550 = vmatprep.subr.mxu0 0.0
    %1551 = vmatpush1.xpose.msra.mxu0 0.0
    %1552 = vmatprep.subr.mxu0 0.0
    %1553 = vmatpush1.xpose.msra.mxu0 0.0
    %1554 = vmatprep.subr.mxu0 0.0
    %1555 = vmatpush1.xpose.msra.mxu0 0.0
    %1556 = vmatprep.subr.mxu0 0.0
    %1557 = vmatpush1.xpose.msra.mxu0 0.0
    %1558 = vmatprep.subr.mxu0 0.0
    %1559 = vmatpush1.xpose.msra.mxu0 0.0
    %1560 = vmatprep.subr.mxu0 0.0
    %1561 = vmatpush1.xpose.msra.mxu0 0.0
    %1562 = vmatprep.subr.mxu0 0.0
    %1563 = vmatpush1.xpose.msra.mxu0 0.0
    %1564 = vmatprep.subr.mxu0 0.0
    %1565 = vmatpush1.xpose.msra.mxu0 0.0
    %1566 = vmatprep.mubr.f32.mxu0 0.0
    %1567 = vmatmul.mubr.f32.gmra.mrb[0].mxu0 %v1498
    %v1568 = vpop.f32.mrb[0].mxu0
    %v1569 = vadd.f32 0.0, %v1568
    %v1570 = vpop.f32.mrb[0].mxu0
    %1571 = vdwg.mxu0
    %1572 = vrot.lane.b32.xlu0 %v155, 32
    %v1573 = vpop.permute.xlu0 %1572
    %1574 = vrot.lane.b32.xlu0 %v157, 32
    %v1575 = vpop.permute.xlu0 %1574
    %v1576 = vsel %vm239, %v1573, 0
    %v1578 = vsel %vm239, %v1575, 0
    %1580 = vmatprep.subr.mxu0 0.0
    %1581 = vmatpush1.xpose.msra.mxu0 %v1578
    %1582 = vmatprep.subr.mxu0 0.0
    %1583 = vmatpush1.xpose.msra.mxu0 0.0
    %1584 = vmatprep.subr.mxu0 0.0
    %1585 = vmatpush1.xpose.msra.mxu0 0.0
    %1586 = vmatprep.subr.mxu0 0.0
    %1587 = vmatpush1.xpose.msra.mxu0 0.0
    %1588 = vmatprep.subr.mxu0 0.0
    %1589 = vmatpush1.xpose.msra.mxu0 0.0
    %1590 = vmatprep.subr.mxu0 0.0
    %1591 = vmatpush1.xpose.msra.mxu0 0.0
    %1592 = vmatprep.subr.mxu0 0.0
    %1593 = vmatpush1.xpose.msra.mxu0 0.0
    %1594 = vmatprep.subr.mxu0 0.0
    %1595 = vmatpush1.xpose.msra.mxu0 0.0
    %1596 = vmatprep.subr.mxu0 0.0
    %1597 = vmatpush1.xpose.msra.mxu0 0.0
    %1598 = vmatprep.subr.mxu0 0.0
    %1599 = vmatpush1.xpose.msra.mxu0 0.0
    %1600 = vmatprep.subr.mxu0 0.0
    %1601 = vmatpush1.xpose.msra.mxu0 0.0
    %1602 = vmatprep.subr.mxu0 0.0
    %1603 = vmatpush1.xpose.msra.mxu0 0.0
    %1604 = vmatprep.subr.mxu0 0.0
    %1605 = vmatpush1.xpose.msra.mxu0 0.0
    %1606 = vmatprep.subr.mxu0 0.0
    %1607 = vmatpush1.xpose.msra.mxu0 0.0
    %1608 = vmatprep.subr.mxu0 0.0
    %1609 = vmatpush1.xpose.msra.mxu0 0.0
    %1610 = vmatprep.subr.mxu0 0.0
    %1611 = vmatpush1.xpose.msra.mxu0 0.0
    %1612 = vmatprep.subr.mxu0 0.0
    %1613 = vmatpush1.xpose.msra.mxu0 0.0
    %1614 = vmatprep.subr.mxu0 0.0
    %1615 = vmatpush1.xpose.msra.mxu0 0.0
    %1616 = vmatprep.subr.mxu0 0.0
    %1617 = vmatpush1.xpose.msra.mxu0 0.0
    %1618 = vmatprep.subr.mxu0 0.0
    %1619 = vmatpush1.xpose.msra.mxu0 0.0
    %1620 = vmatprep.subr.mxu0 0.0
    %1621 = vmatpush1.xpose.msra.mxu0 0.0
    %1622 = vmatprep.subr.mxu0 0.0
    %1623 = vmatpush1.xpose.msra.mxu0 0.0
    %1624 = vmatprep.subr.mxu0 0.0
    %1625 = vmatpush1.xpose.msra.mxu0 0.0
    %1626 = vmatprep.subr.mxu0 0.0
    %1627 = vmatpush1.xpose.msra.mxu0 0.0
    %1628 = vmatprep.subr.mxu0 0.0
    %1629 = vmatpush1.xpose.msra.mxu0 0.0
    %1630 = vmatprep.subr.mxu0 0.0
    %1631 = vmatpush1.xpose.msra.mxu0 0.0
    %1632 = vmatprep.subr.mxu0 0.0
    %1633 = vmatpush1.xpose.msra.mxu0 0.0
    %1634 = vmatprep.subr.mxu0 0.0
    %1635 = vmatpush1.xpose.msra.mxu0 0.0
    %1636 = vmatprep.subr.mxu0 0.0
    %1637 = vmatpush1.xpose.msra.mxu0 0.0
    %1638 = vmatprep.subr.mxu0 0.0
    %1639 = vmatpush1.xpose.msra.mxu0 0.0
    %1640 = vmatprep.subr.mxu0 0.0
    %1641 = vmatpush1.xpose.msra.mxu0 0.0
    %1642 = vmatprep.subr.mxu0 0.0
    %1643 = vmatpush1.xpose.msra.mxu0 0.0
    %1644 = vmatprep.mubr.f32.mxu0 0.0
    %1645 = vmatmul.mubr.f32.gmra.mrb[0].mxu0 %v1576
    %v1646 = vpop.f32.mrb[0].mxu0
    %v1647 = vadd.f32 0.0, %v1646
    %v1648 = vpop.f32.mrb[0].mxu0
    %1649 = vdwg.mxu0
    %v1650 = vmul.f32 %v1569, 0.1
    %v1651 = vmul.f32 %v1647, 0.1
    %v1652 = vsel %vm395, %v1650, -inf
    %v1653 = vsel %vm395, %v1651, -inf
    %v1654 = vsel %vm398, %v1652, -inf
    %1655 = vmax.xlane.f32.xlu0 %v1654
    %v1656 = vpop.xlane.xlu0 %1655
    %v1657 = vsel %vm398, %v1653, -inf
    %1658 = vmax.xlane.f32.xlu0 %v1657
    %v1659 = vpop.xlane.xlu0 %1658
    %v1660 = vsub.f32 %v1652, %v1656
    %v1661 = vsub.f32 %v1653, %v1659
    %v1662 = vmul.f32 %v1660, 1.442695
    %v1663 = vpow.pop %v1662
    %v1664 = vmul.f32 %v1661, 1.442695
    %v1665 = vpow.pop %v1664
    %v1666 = vsel %vm398, %v1663, 0.0
    %1667 = vadd.xlane.f32.xlu0 %v1666
    %v1668 = vpop.xlane.xlu0 %1667
    %v1669 = vsel %vm398, %v1665, 0.0
    %1670 = vadd.xlane.f32.xlu0 %v1669
    %v1671 = vpop.xlane.xlu0 %1670
    %v1672 = vrcp.pop %v1668
    %v1673 = vrcp.pop %v1671
    %v1674 = vmul.f32 %v1663, %v1672
    %v1675 = vmul.f32 %v1665, %v1673
    %1676 = vrot.lane.b32.xlu0 %v226, 32
    %v1677 = vpop.permute.xlu0 %1676
    %v1680 = vsel %vm398, %v1674, 0
    %1682 = vmatprep.subr.mxu0 0.0
    %1683 = vmatpush1.msra.mxu0 %v1677
    %1684 = vmatprep.subr.mxu0 0.0
    %1685 = vmatpush1.msra.mxu0 0.0
    %1686 = vmatprep.subr.mxu0 0.0
    %1687 = vmatpush1.msra.mxu0 0.0
    %1688 = vmatprep.subr.mxu0 0.0
    %1689 = vmatpush1.msra.mxu0 0.0
    %1690 = vmatprep.subr.mxu0 0.0
    %1691 = vmatpush1.msra.mxu0 0.0
    %1692 = vmatprep.subr.mxu0 0.0
    %1693 = vmatpush1.msra.mxu0 0.0
    %1694 = vmatprep.subr.mxu0 0.0
    %1695 = vmatpush1.msra.mxu0 0.0
    %1696 = vmatprep.subr.mxu0 0.0
    %1697 = vmatpush1.msra.mxu0 0.0
    %1698 = vmatprep.subr.mxu0 0.0
    %1699 = vmatpush1.msra.mxu0 0.0
    %1700 = vmatprep.subr.mxu0 0.0
    %1701 = vmatpush1.msra.mxu0 0.0
    %1702 = vmatprep.subr.mxu0 0.0
    %1703 = vmatpush1.msra.mxu0 0.0
    %1704 = vmatprep.subr.mxu0 0.0
    %1705 = vmatpush1.msra.mxu0 0.0
    %1706 = vmatprep.subr.mxu0 0.0
    %1707 = vmatpush1.msra.mxu0 0.0
    %1708 = vmatprep.subr.mxu0 0.0
    %1709 = vmatpush1.msra.mxu0 0.0
    %1710 = vmatprep.subr.mxu0 0.0
    %1711 = vmatpush1.msra.mxu0 0.0
    %1712 = vmatprep.subr.mxu0 0.0
    %1713 = vmatpush1.msra.mxu0 0.0
    %1714 = vmatprep.subr.mxu0 0.0
    %1715 = vmatpush1.msra.mxu0 0.0
    %1716 = vmatprep.subr.mxu0 0.0
    %1717 = vmatpush1.msra.mxu0 0.0
    %1718 = vmatprep.subr.mxu0 0.0
    %1719 = vmatpush1.msra.mxu0 0.0
    %1720 = vmatprep.subr.mxu0 0.0
    %1721 = vmatpush1.msra.mxu0 0.0
    %1722 = vmatprep.subr.mxu0 0.0
    %1723 = vmatpush1.msra.mxu0 0.0
    %1724 = vmatprep.subr.mxu0 0.0
    %1725 = vmatpush1.msra.mxu0 0.0
    %1726 = vmatprep.subr.mxu0 0.0
    %1727 = vmatpush1.msra.mxu0 0.0
    %1728 = vmatprep.subr.mxu0 0.0
    %1729 = vmatpush1.msra.mxu0 0.0
    %1730 = vmatprep.subr.mxu0 0.0
    %1731 = vmatpush1.msra.mxu0 0.0
    %1732 = vmatprep.subr.mxu0 0.0
    %1733 = vmatpush1.msra.mxu0 0.0
    %1734 = vmatprep.subr.mxu0 0.0
    %1735 = vmatpush1.msra.mxu0 0.0
    %1736 = vmatprep.subr.mxu0 0.0
    %1737 = vmatpush1.msra.mxu0 0.0
    %1738 = vmatprep.subr.mxu0 0.0
    %1739 = vmatpush1.msra.mxu0 0.0
    %1740 = vmatprep.subr.mxu0 0.0
    %1741 = vmatpush1.msra.mxu0 0.0
    %1742 = vmatprep.subr.mxu0 0.0
    %1743 = vmatpush1.msra.mxu0 0.0
    %1744 = vmatprep.subr.mxu0 0.0
    %1745 = vmatpush1.msra.mxu0 0.0
    %1746 = vmatprep.mubr.f32.mxu0 0.0
    %1747 = vmatmul.mubr.f32.gmra.mrb[0].mxu0 %v1680
    %v1748 = vpop.f32.mrb[0].mxu0
    %v1749 = vadd.f32 0.0, %v1748
    %v1750 = vpop.f32.mrb[0].mxu0
    %1751 = vdwg.mxu0
    %1752 = vrot.lane.b32.xlu0 %v231, 32
    %v1753 = vpop.permute.xlu0 %1752
    %v1756 = vsel %vm398, %v1675, 0
    %1758 = vmatprep.subr.mxu0 0.0
    %1759 = vmatpush1.msra.mxu0 %v1753
    %1760 = vmatprep.subr.mxu0 0.0
    %1761 = vmatpush1.msra.mxu0 0.0
    %1762 = vmatprep.subr.mxu0 0.0
    %1763 = vmatpush1.msra.mxu0 0.0
    %1764 = vmatprep.subr.mxu0 0.0
    %1765 = vmatpush1.msra.mxu0 0.0
    %1766 = vmatprep.subr.mxu0 0.0
    %1767 = vmatpush1.msra.mxu0 0.0
    %1768 = vmatprep.subr.mxu0 0.0
    %1769 = vmatpush1.msra.mxu0 0.0
    %1770 = vmatprep.subr.mxu0 0.0
    %1771 = vmatpush1.msra.mxu0 0.0
    %1772 = vmatprep.subr.mxu0 0.0
    %1773 = vmatpush1.msra.mxu0 0.0
    %1774 = vmatprep.subr.mxu0 0.0
    %1775 = vmatpush1.msra.mxu0 0.0
    %1776 = vmatprep.subr.mxu0 0.0
    %1777 = vmatpush1.msra.mxu0 0.0
    %1778 = vmatprep.subr.mxu0 0.0
    %1779 = vmatpush1.msra.mxu0 0.0
    %1780 = vmatprep.subr.mxu0 0.0
    %1781 = vmatpush1.msra.mxu0 0.0
    %1782 = vmatprep.subr.mxu0 0.0
    %1783 = vmatpush1.msra.mxu0 0.0
    %1784 = vmatprep.subr.mxu0 0.0
    %1785 = vmatpush1.msra.mxu0 0.0
    %1786 = vmatprep.subr.mxu0 0.0
    %1787 = vmatpush1.msra.mxu0 0.0
    %1788 = vmatprep.subr.mxu0 0.0
    %1789 = vmatpush1.msra.mxu0 0.0
    %1790 = vmatprep.subr.mxu0 0.0
    %1791 = vmatpush1.msra.mxu0 0.0
    %1792 = vmatprep.subr.mxu0 0.0
    %1793 = vmatpush1.msra.mxu0 0.0
    %1794 = vmatprep.subr.mxu0 0.0
    %1795 = vmatpush1.msra.mxu0 0.0
    %1796 = vmatprep.subr.mxu0 0.0
    %1797 = vmatpush1.msra.mxu0 0.0
    %1798 = vmatprep.subr.mxu0 0.0
    %1799 = vmatpush1.msra.mxu0 0.0
    %1800 = vmatprep.subr.mxu0 0.0
    %1801 = vmatpush1.msra.mxu0 0.0
    %1802 = vmatprep.subr.mxu0 0.0
    %1803 = vmatpush1.msra.mxu0 0.0
    %1804 = vmatprep.subr.mxu0 0.0
    %1805 = vmatpush1.msra.mxu0 0.0
    %1806 = vmatprep.subr.mxu0 0.0
    %1807 = vmatpush1.msra.mxu0 0.0
    %1808 = vmatprep.subr.mxu0 0.0
    %1809 = vmatpush1.msra.mxu0 0.0
    %1810 = vmatprep.subr.mxu0 0.0
    %1811 = vmatpush1.msra.mxu0 0.0
    %1812 = vmatprep.subr.mxu0 0.0
    %1813 = vmatpush1.msra.mxu0 0.0
    %1814 = vmatprep.subr.mxu0 0.0
    %1815 = vmatpush1.msra.mxu0 0.0
    %1816 = vmatprep.subr.mxu0 0.0
    %1817 = vmatpush1.msra.mxu0 0.0
    %1818 = vmatprep.subr.mxu0 0.0
    %1819 = vmatpush1.msra.mxu0 0.0
    %1820 = vmatprep.subr.mxu0 0.0
    %1821 = vmatpush1.msra.mxu0 0.0
    %1822 = vmatprep.mubr.f32.mxu0 0.0
    %1823 = vmatmul.mubr.f32.gmra.mrb[0].mxu0 %v1756
    %v1824 = vpop.f32.mrb[0].mxu0
    %v1825 = vadd.f32 0.0, %v1824
    %v1826 = vpop.f32.mrb[0].mxu0
    %1827 = vdwg.mxu0
    %v1828 = vld [vmem:[%s2 + $0x60] sm:$0xff]
    %v1829 = vld [vmem:[%s2 + $0x68] sm:$0xff]
    %v1830 = vld [vmem:[%s2 + $0x70] sm:$0xff]
    %v1831 = vld [vmem:[%s2 + $0x78] sm:$0xff]
    %v1833 = vsel %vm239, %v1749, 0
    %v1836 = vsel %vm239, %v1825, 0
    %1838 = vmatprep.subr.mxu0 0.0
    %1839 = vmatpush1.msra.mxu0 %v1828
    %1840 = vmatprep.subr.mxu0 0.0
    %1841 = vmatpush1.msra.mxu0 %v1829
    %1842 = vmatprep.subr.mxu0 0.0
    %1843 = vmatpush1.msra.mxu0 %v1830
    %1844 = vmatprep.subr.mxu0 0.0
    %1845 = vmatpush1.msra.mxu0 %v1831
    %1846 = vmatprep.subr.mxu0 0.0
    %1847 = vmatpush1.msra.mxu0 0.0
    %1848 = vmatprep.subr.mxu0 0.0
    %1849 = vmatpush1.msra.mxu0 0.0
    %1850 = vmatprep.subr.mxu0 0.0
    %1851 = vmatpush1.msra.mxu0 0.0
    %1852 = vmatprep.subr.mxu0 0.0
    %1853 = vmatpush1.msra.mxu0 0.0
    %1854 = vmatprep.subr.mxu0 0.0
    %1855 = vmatpush1.msra.mxu0 0.0
    %1856 = vmatprep.subr.mxu0 0.0
    %1857 = vmatpush1.msra.mxu0 0.0
    %1858 = vmatprep.subr.mxu0 0.0
    %1859 = vmatpush1.msra.mxu0 0.0
    %1860 = vmatprep.subr.mxu0 0.0
    %1861 = vmatpush1.msra.mxu0 0.0
    %1862 = vmatprep.subr.mxu0 0.0
    %1863 = vmatpush1.msra.mxu0 0.0
    %1864 = vmatprep.subr.mxu0 0.0
    %1865 = vmatpush1.msra.mxu0 0.0
    %1866 = vmatprep.subr.mxu0 0.0
    %1867 = vmatpush1.msra.mxu0 0.0
    %1868 = vmatprep.subr.mxu0 0.0
    %1869 = vmatpush1.msra.mxu0 0.0
    %1870 = vmatprep.subr.mxu0 0.0
    %1871 = vmatpush1.msra.mxu0 0.0
    %1872 = vmatprep.subr.mxu0 0.0
    %1873 = vmatpush1.msra.mxu0 0.0
    %1874 = vmatprep.subr.mxu0 0.0
    %1875 = vmatpush1.msra.mxu0 0.0
    %1876 = vmatprep.subr.mxu0 0.0
    %1877 = vmatpush1.msra.mxu0 0.0
    %1878 = vmatprep.subr.mxu0 0.0
    %1879 = vmatpush1.msra.mxu0 0.0
    %1880 = vmatprep.subr.mxu0 0.0
    %1881 = vmatpush1.msra.mxu0 0.0
    %1882 = vmatprep.subr.mxu0 0.0
    %1883 = vmatpush1.msra.mxu0 0.0
    %1884 = vmatprep.subr.mxu0 0.0
    %1885 = vmatpush1.msra.mxu0 0.0
    %1886 = vmatprep.subr.mxu0 0.0
    %1887 = vmatpush1.msra.mxu0 0.0
    %1888 = vmatprep.subr.mxu0 0.0
    %1889 = vmatpush1.msra.mxu0 0.0
    %1890 = vmatprep.subr.mxu0 0.0
    %1891 = vmatpush1.msra.mxu0 0.0
    %1892 = vmatprep.subr.mxu0 0.0
    %1893 = vmatpush1.msra.mxu0 0.0
    %1894 = vmatprep.subr.mxu0 0.0
    %1895 = vmatpush1.msra.mxu0 0.0
    %1896 = vmatprep.subr.mxu0 0.0
    %1897 = vmatpush1.msra.mxu0 0.0
    %1898 = vmatprep.subr.mxu0 0.0
    %1899 = vmatpush1.msra.mxu0 0.0
    %1900 = vmatprep.subr.mxu0 0.0
    %1901 = vmatpush1.msra.mxu0 0.0
    %1902 = vmatprep.mubr.f32.mxu0 0.0
    %1903 = vmatmul.mubr.f32.gmra.mrb[0].mxu0 %v1833
    %v1904 = vpop.f32.mrb[0].mxu0
    %v1905 = vadd.f32 0.0, %v1904
    %v1906 = vpop.f32.mrb[0].mxu0
    %1907 = vmatprep.mubr.f32.mxu0 0.0
    %1908 = vmatmul.mubr.f32.gmra.mrb[0].mxu0 %v1836
    %v1909 = vpop.f32.mrb[0].mxu0
    %v1910 = vadd.f32 0.0, %v1909
    %v1911 = vpop.f32.mrb[0].mxu0
    %1912 = vdwg.mxu0
    %v1913 = vadd.f32 %v1492, %v1905
    %v1914 = vadd.f32 %v1493, %v1910
    %v1915 = vld [vmem:[%s3] sm:$0x1]
    %v1917 = vlaneseq
    %v1918 = vshrl.u32 %v1917, 7
    %v1919 = vsub.s32 0, %v1918
    %v1920 = vrot.slane %v1915, %v1919
    %v1922 = vadd.f32 %v1913, %v1920
    %v1923 = vadd.f32 %v1914, %v1920
    %vm1924 = vcmask 818176
    %1925 = vst.msk [vmem:[#allocation5] sm:$0xff] %vm1924, %v1922
    %1926 = vst.msk [vmem:[#allocation5 + $0x8] sm:$0xff] %vm1924, %v1923
    // Predicated region
    $region22: #{tpu_custom_call.1} parent=1 // pred_check
      _
    $region23: #{tpu_custom_call.1} parent=1 // pred_check_branch
      %1928 = sbr.rel (0) target = $region25
    $region24: #{tpu_custom_call.1} parent=1 // pred_region
      %s1930 = ssub.s32 256, 256
      %1931 = vsyncadd [#allocation4], %s1930
      %s1932 = sshll.u32 [#allocation5], 4
      %s1933 = int_to_ptr.vmem [resolvable:$true] %s1932
      %1938 = dma.vmem_to_hbm [thread:$0]  %s1933, 256, %s4, [#allocation4], 128, 128, 8
    $region25: #{tpu_custom_call.1} parent=1 // pred_fallthru
      _
    // Predicated region
    $region26: #{tpu_custom_call.1} parent=1 // pred_check
      _
    $region27: #{tpu_custom_call.1} parent=1 // pred_check_branch
      %1940 = sbr.rel (0) target = $region29
    $region28: #{tpu_custom_call.1} parent=1 // pred_region
      %1941 = dma.done [#allocation4], 256
    $region29: #{tpu_custom_call.1} parent=1 // pred_fallthru
      _
    %1942 = vsyncpa [#allocation3], 1
    %1943 = vsyncpa [#allocation4], 1

</llo_original>
